<compile_context>
chip_gen: v7x
topology: tpu7x:2x2x1
jax: 0.10.0
libtpu: 0.0.40
codegen_flags: <defaults>
</compile_context>

<pallas_src>
import jax
import jax.numpy as jnp
from jax.experimental import pallas as pl
from jax.experimental.pallas import tpu as pltpu

HIDDEN = 1024   # base-model pooled width  (Linear(1024, 512) input)
INTER = 512     # head intermediate width (folded away inside the kernel)
OUT = 1         # scalar preference score
TILE_J = 512    # tile over the pooler-output / hidden dim
N_TILES = HIDDEN // TILE_J


def _fused_kernel(x_ref, wp_ref, bp_ref, fold_ref, bias_ref, o_ref):
    """Grid step j (tile of the 1024-wide pooler-output dim):
         p_j  = tanh(x @ Wp_tile_j + bp_j)              # [B, TILE_J] f32
         o   += sum(p_j * fold_j, axis=-1)              # [B, 1]
       fold = w2 @ W1 (Linear2 folded into Linear1, computed in f32) and the
       folded bias scalar (w2.b1 + b2) is seeded into o on step 0.
       Dropout1 (p=0.5) / Dropout2 (p=0.8) are identity in eval mode.
    """
    j = pl.program_id(0)

    @pl.when(j == 0)
    def _():
        o_ref[...] = jnp.zeros_like(o_ref) + bias_ref[0, 0]

    # pooler tile: bf16 MXU dot, f32 accumulate, tanh once per tile
    p = jnp.tanh(
        jnp.dot(x_ref[...], wp_ref[...], preferred_element_type=jnp.float32)
        + bp_ref[...])                                        # [B, TILE_J] f32
    # folded head has N=1: VPU multiply + lane reduce (no MXU pass needed)
    o_ref[...] += jnp.sum(p * fold_ref[...], axis=-1, keepdims=True)


def fused_pooler_head(x_mean, params):
    """x_mean: [B, 1024] f32 (mean-pooled embeddings)  ->  [B, 1] f32."""
    B = x_mean.shape[0]
    Bp = ((B + 7) // 8) * 8                       # sublane-align the batch
    x_bf = x_mean.astype(jnp.bfloat16)
    if Bp != B:
        x_bf = jnp.pad(x_bf, ((0, Bp - B), (0, 0)))

    out = pl.pallas_call(
        _fused_kernel,
        out_shape=jax.ShapeDtypeStruct((Bp, OUT), jnp.float32),
        grid_spec=pltpu.PrefetchScalarGridSpec(
            num_scalar_prefetch=0,
            grid=(N_TILES,),
            in_specs=[
                pl.BlockSpec((Bp, HIDDEN), lambda j: (0, 0)),            # x (resident)
                pl.BlockSpec((None, HIDDEN, TILE_J), lambda j: (j, 0, 0)),  # Wp slab (contiguous bf16)
                pl.BlockSpec((1, TILE_J), lambda j: (0, j)),             # pooler bias tile
                pl.BlockSpec((1, TILE_J), lambda j: (0, j)),             # folded W1*w2 tile
                pl.BlockSpec(memory_space=pltpu.MemorySpace.SMEM),       # folded bias scalar
            ],
            out_specs=pl.BlockSpec((Bp, OUT), lambda j: (0, 0)),
        ),
        compiler_params=pltpu.CompilerParams(
            dimension_semantics=("arbitrary",),
        ),
    )(x_bf, params["pooler_w_tiles"], params["pooler_b"],
      params["fold_row"], params["fold_bias"])
    return out[:B]


def user_preference_forward(input_ids, params):
    # TODO(synk): the real pretrained transformer base_model has no clean Pallas
    # equivalent; embedding lookup + mean-pool stands in for its encoder.  The
    # tanh pooler + (folded) preference head run fused in the Pallas kernel.
    emb = jnp.take(params["embed"], input_ids, axis=0)    # [B, S, H]
    x_mean = jnp.mean(emb, axis=1)                        # [B, H] f32
    return fused_pooler_head(x_mean, params)


def init_params(key, vocab_size=100):
    ks = jax.random.split(key, 7)
    # PyTorch Linear stores W as [out, in].
    w1 = jax.random.normal(ks[0], (INTER, HIDDEN), jnp.float32) * 0.02
    b1 = jax.random.normal(ks[1], (INTER,), jnp.float32) * 0.02
    w2 = jax.random.normal(ks[2], (OUT, INTER), jnp.float32) * 0.02
    b2 = jax.random.normal(ks[3], (OUT,), jnp.float32) * 0.02
    embed = jax.random.normal(ks[4], (vocab_size, HIDDEN), jnp.float32) * 0.02
    pooler_w = jax.random.normal(ks[5], (HIDDEN, HIDDEN), jnp.float32) * 0.02
    pooler_b = jax.random.normal(ks[6], (HIDDEN,), jnp.float32) * 0.02

    # Fold Linear2 into Linear1 in f32 (dropouts are identity in eval mode):
    #   y = (p @ W1^T + b1) @ w2^T + b2 = p @ (w2 @ W1)^T + (w2 @ b1 + b2)
    fold_row = (w2 @ w1).astype(jnp.float32)               # [1, 1024] f32
    fold_bias = (w2 @ b1 + b2).reshape(1, 1)               # [1, 1]    f32 (SMEM)

    # Pooler: pooled = tanh(x @ pooler_w^T + pooler_b).  Store the transposed
    # weight re-laid-out as [N_TILES, HIDDEN, TILE_J] bf16 so each grid step's
    # DMA is one contiguous slab (no strided column slicing).
    wp_t = pooler_w.T                                       # [in, out] = [1024, 1024]
    wp_tiles = (wp_t.reshape(HIDDEN, N_TILES, TILE_J)
                    .transpose(1, 0, 2)
                    .astype(jnp.bfloat16))                  # [N_TILES, 1024, TILE_J]

    return {
        "pooler_w_tiles": wp_tiles,                         # bf16, contiguous slabs
        "pooler_b": pooler_b.reshape(1, HIDDEN),            # [1, 1024] f32
        "fold_row": fold_row,                               # [1, 1024] f32
        "fold_bias": fold_bias,                             # [1, 1]    f32
        "embed": embed,                                     # [vocab, 1024] f32
    }


if __name__ == "__main__":
    key = jax.random.PRNGKey(0)
    params = init_params(key, vocab_size=100)

    B, S = 2, 8
    input_ids = jax.random.randint(jax.random.PRNGKey(1), (B, S), 0, 100,
                                   dtype=jnp.int32)

    out = user_preference_forward(input_ids, params)
    out = jax.block_until_ready(out)

    # Pure-JAX reference mirroring the kernel math (bf16 pooler weight/input,
    # f32 accumulation, eval-mode dropouts identity, Linear2 folded in f32).
    emb = jnp.take(params["embed"], input_ids, axis=0)
    x_mean = jnp.mean(emb, axis=1)
    x_bf = x_mean.astype(jnp.bfloat16).astype(jnp.float32)
    wp_t_f32 = (params["pooler_w_tiles"].astype(jnp.float32)
                .transpose(1, 0, 2).reshape(HIDDEN, HIDDEN))
    p = jnp.tanh(x_bf @ wp_t_f32 + params["pooler_b"])
    ref = (jnp.sum(p * params["fold_row"], axis=-1, keepdims=True)
           + params["fold_bias"])

    assert out.shape == (B, 1)
    assert jnp.allclose(out, ref, atol=2e-3, rtol=2e-3), (out, ref)

    print("KERNEL_OK")
</pallas_src>

<mosaic_0001>
module attributes {stable_mosaic.version = 11 : i64} {
  func.func @_fused_kernel(%arg0: i32, %arg1: memref<8x1024xbf16, #tpu.memory_space<vmem>>, %arg2: memref<1x1024x512xbf16, #tpu.memory_space<vmem>>, %arg3: memref<1x512xf32, #tpu.memory_space<vmem>>, %arg4: memref<1x512xf32, #tpu.memory_space<vmem>>, %arg5: memref<1x1xf32, #tpu.memory_space<smem>>, %arg6: memref<8x1xf32, #tpu.memory_space<vmem>>) attributes {dimension_semantics = [#tpu.dimension_semantics<arbitrary>], iteration_bounds = array<i64: 2>, scalar_prefetch = 0 : i64, scratch_operands = 0 : i64, tpu.core_type = #tpu.core_type<tc>, window_params = [{pipeline_mode = #tpu.pipeline_mode<synchronous>, transform_indices = @transform_0, window_bounds = array<i64: 8, 1024>}, {transform_indices = @transform_1, window_bounds = array<i64: 1, 1024, 512>}, {transform_indices = @transform_2, window_bounds = array<i64: 1, 512>}, {transform_indices = @transform_3, window_bounds = array<i64: 1, 512>}, {transform_indices = @transform_4, window_bounds = array<i64: 1, 1>}, {pipeline_mode = #tpu.pipeline_mode<synchronous>, transform_indices = @transform_5, window_bounds = array<i64: 8, 1>}]} {
    %c0_i32 = arith.constant 0 : i32
    %0 = arith.cmpi eq, %arg0, %c0_i32 : i32
    %1 = arith.extui %0 : i1 to i32
    %c0_i32_0 = arith.constant 0 : i32
    %2 = arith.cmpi ne, %1, %c0_i32_0 : i32
    scf.if %2 {
      %cst_14 = arith.constant 0.000000e+00 : f32
      %19 = vector.broadcast %cst_14 : f32 to vector<8x1xf32>
      %c0_15 = arith.constant 0 : index
      %c0_16 = arith.constant 0 : index
      %20 = memref.load %arg5[%c0_15, %c0_16] : memref<1x1xf32, #tpu.memory_space<smem>>
      %21 = vector.broadcast %20 : f32 to vector<8x1xf32>
      %22 = arith.addf %19, %21 : vector<8x1xf32>
      %c0_17 = arith.constant 0 : index
      %c0_18 = arith.constant 0 : index
      %23 = vector.load %arg6[%c0_17, %c0_18] : memref<8x1xf32, #tpu.memory_space<vmem>>, vector<8x1xf32>
      tpu.vector_store %arg6[%c0_17, %c0_18], %22 {strides = array<i32>} : memref<8x1xf32, #tpu.memory_space<vmem>>, vector<8x1xf32>,
    } else {
    }
    %c0 = arith.constant 0 : index
    %c0_1 = arith.constant 0 : index
    %3 = vector.load %arg1[%c0, %c0_1] : memref<8x1024xbf16, #tpu.memory_space<vmem>>, vector<8x1024xbf16>
    %c0_2 = arith.constant 0 : index
    %c0_3 = arith.constant 0 : index
    %c0_4 = arith.constant 0 : index
    %4 = vector.load %arg2[%c0_2, %c0_3, %c0_4] : memref<1x1024x512xbf16, #tpu.memory_space<vmem>>, vector<1x1024x512xbf16>
    %5 = vector.shape_cast %4 : vector<1x1024x512xbf16> to vector<1024x512xbf16>
    %cst = arith.constant dense<0.000000e+00> : vector<8x512xf32>
    %6 = tpu.matmul %3, %5, %cst {dimension_numbers = #tpu.dot_dimension_numbers<[1], [0], [0], [1], [0, 0, 1, 1], [], []>} : vector<8x1024xbf16>, vector<1024x512xbf16>, vector<8x512xf32> -> vector<8x512xf32>
    %c0_5 = arith.constant 0 : index
    %c0_6 = arith.constant 0 : index
    %7 = vector.load %arg3[%c0_5, %c0_6] : memref<1x512xf32, #tpu.memory_space<vmem>>, vector<1x512xf32>
    %8 = vector.broadcast %7 : vector<1x512xf32> to vector<8x512xf32>
    %9 = arith.addf %6, %8 : vector<8x512xf32>
    %10 = math.tanh %9 : vector<8x512xf32>
    %c0_7 = arith.constant 0 : index
    %c0_8 = arith.constant 0 : index
    %11 = vector.load %arg6[%c0_7, %c0_8] : memref<8x1xf32, #tpu.memory_space<vmem>>, vector<8x1xf32>
    %c0_9 = arith.constant 0 : index
    %c0_10 = arith.constant 0 : index
    %12 = vector.load %arg4[%c0_9, %c0_10] : memref<1x512xf32, #tpu.memory_space<vmem>>, vector<1x512xf32>
    %13 = vector.broadcast %12 : vector<1x512xf32> to vector<8x512xf32>
    %14 = arith.mulf %10, %13 : vector<8x512xf32>
    %cst_11 = arith.constant dense<0.000000e+00> : vector<8xf32>
    %15 = vector.multi_reduction <add>, %14, %cst_11 [1] : vector<8x512xf32> to vector<8xf32>
    %16 = vector.shape_cast %15 : vector<8xf32> to vector<8x1xf32>
    %17 = arith.addf %11, %16 : vector<8x1xf32>
    %c0_12 = arith.constant 0 : index
    %c0_13 = arith.constant 0 : index
    %18 = vector.load %arg6[%c0_12, %c0_13] : memref<8x1xf32, #tpu.memory_space<vmem>>, vector<8x1xf32>
    tpu.vector_store %arg6[%c0_12, %c0_13], %17 {strides = array<i32>} : memref<8x1xf32, #tpu.memory_space<vmem>>, vector<8x1xf32>,
    return
  }
  func.func @transform_0(%arg0: i32) -> (i32, i32) {
    %c0_i32 = arith.constant 0 : i32
    %c0_i32_0 = arith.constant 0 : i32
    %c0_i32_1 = arith.constant 0 : i32
    return %c0_i32, %c0_i32_0 : i32, i32
  }
  func.func @transform_1(%arg0: i32) -> (i32, i32, i32) {
    %c0_i32 = arith.constant 0 : i32
    %c0_i32_0 = arith.constant 0 : i32
    %c0_i32_1 = arith.constant 0 : i32
    return %arg0, %c0_i32, %c0_i32_0 : i32, i32, i32
  }
  func.func @transform_2(%arg0: i32) -> (i32, i32) {
    %c0_i32 = arith.constant 0 : i32
    %c0_i32_0 = arith.constant 0 : i32
    return %c0_i32, %arg0 : i32, i32
  }
  func.func @transform_3(%arg0: i32) -> (i32, i32) {
    %c0_i32 = arith.constant 0 : i32
    %c0_i32_0 = arith.constant 0 : i32
    return %c0_i32, %arg0 : i32, i32
  }
  func.func @transform_4(%arg0: i32) -> (i32, i32) {
    %c0_i32 = arith.constant 0 : i32
    %c0_i32_0 = arith.constant 0 : i32
    %c0_i32_1 = arith.constant 0 : i32
    return %c0_i32, %c0_i32_0 : i32, i32
  }
  func.func @transform_5(%arg0: i32) -> (i32, i32) {
    %c0_i32 = arith.constant 0 : i32
    %c0_i32_0 = arith.constant 0 : i32
    %c0_i32_1 = arith.constant 0 : i32
    return %c0_i32, %c0_i32_0 : i32, i32
  }
}

</mosaic_0001>

<llo_original>
// kernel: tpu_custom_call.1
$region0: #{tpu_custom_call.1}
  #allocation0 [shape = 'u32[]', space=smem, size = 0x4, offset = 0x4, fixed_abs, tag = 'smem constant byte address 0x4 - core index']
  #allocation1 [shape = 'u32[144,128]{1,0:T(1,128)}', space=vmem, size = 0x12000, scoped, tag = 'internal scratch']
  #allocation2 [shape = 'f32[1,1]{1,0:T(1,128)S(6)}', space=smem, size = 0x200, scoped, tag = 'scoped memory for tpu_custom_call.1']
  %s0 = inlined_call_operand.hbm [shape: bf16[8,1024], index: 0, kind: input, shape index: {}]
  %s1 = inlined_call_operand.hbm [shape: bf16[2,1024,512], index: 1, kind: input, shape index: {}]
  %s2 = inlined_call_operand.hbm [shape: f32[1,1024], index: 2, kind: input, shape index: {}]
  %s3 = inlined_call_operand.hbm [shape: f32[1,1024], index: 3, kind: input, shape index: {}]
  %s4 = inlined_call_operand.<no memory space> [shape: f32[1,1], index: 4, kind: input, shape index: {}]
  %s5 = inlined_call_operand.vmem [shape: f32[8,1], index: 5, kind: output, shape index: {}]
  %s6 = sld [smem:[#allocation0]]
  $region73: #{tpu_custom_call.1} parent=0
    _
  %s8 = ssub.s32 1, %s6
  %s9 = scalar_select 0, %s8, %s6
  %10 = sst [smem:[#allocation2]] %s4
  $region1: #{tpu_custom_call.1} parent=0
    #allocation3 [shape = 'u8[16384]{0}', space=vmem, size = 0x4000, scoped, tag = 'input window, operand 0, single buffered']
    #allocation4 [shape = 's32[2]{0}', space=sflag, size = 0x8, scoped, tag = 'scoped memory for tpu_custom_call.1']
    #allocation5 [shape = 'u8[2097152]{0}', space=vmem, size = 0x200000, scoped, tag = 'input window, operand 1']
    #allocation6 [shape = 's32[2]{0}', space=sflag, size = 0x8, scoped, tag = 'scoped memory for tpu_custom_call.1']
    #allocation7 [shape = 'u8[4096]{0}', space=vmem, size = 0x1000, scoped, tag = 'input window, operand 2']
    #allocation8 [shape = 'u8[4096]{0}', space=vmem, size = 0x1000, scoped, tag = 'input window, operand 3']
    #allocation9 [shape = 's32[2]{0}', space=sflag, size = 0x8, scoped, tag = 'scoped memory for tpu_custom_call.1']
    %11 = vsyncpa [#allocation4], 0
    %12 = vsyncpa [#allocation6], 0
    %s13 = scalar_lea.sflag [#allocation6], 1
    %14 = vsyncpa %s13, 0
    %15 = vsyncpa [#allocation9], 0
    %s16 = scalar_lea.sflag [#allocation9], 1
    %17 = vsyncpa %s16, 0
    loop: start=0, step=1, limit=4
    $region2: #{tpu_custom_call.1} parent=1 // loop_pre_header
      _
    $region3: #{tpu_custom_call.1} parent=1 // loop_header
      %s19 = sphi 0, %s23
      %p20 = scmp.ge.s32.totalorder %s19, 4
      %s27 = sphi 0, %s27
      %s29 = sphi 0, %s27
      %s30 = sphi 0, %s29
      %s44 = sphi 0, %s30
      %s50 = sphi 0, %s52
      %s53 = sphi 0, %s50
      %s54 = sphi 0, %s53
      %s70 = sphi 0, %s54
      %s76 = sphi 0, %s78
      %s79 = sphi 0, %s76
      %s80 = sphi 0, %s79
      %s96 = sphi 0, %s80
      %s102 = sphi 0, %s104
      %s105 = sphi 0, %s102
      %s106 = sphi 0, %s105
      %s122 = sphi 0, %s106
      %s126 = sphi 0, %s126
      %s128 = sphi 0, %s126
      %s129 = sphi 0, %s128
      %s143 = sphi 0, %s129
      %s147 = sphi 0, %s147
      %s149 = sphi 0, %s147
      %s150 = sphi 0, %s149
      %s164 = sphi 0, %s150
    $region4: #{tpu_custom_call.1} parent=1 // loop_header_branch
      %22 = sbr.rel (%p20) target = $region8
    $region5: #{tpu_custom_call.1} parent=1 // loop_body
      %s24 = ssub.s32 %s19, 1
      %s25 = ssub.s32 %s19, 2
      %s26 = sadd.s32 %s19, 1
      %s28 = sadd.s32 %s27, 1
      %p31 = scmp.eq.s32.totalorder %s19, 1
      %p32 = scmp.ne.s32.totalorder %s27, %s29
      %p33 = scmp.eq.s32.totalorder %s19, 0
      %p34 = por %p32, %p33
      %p35 = scmp.ne.s32.totalorder %s27, %s29
      %p36 = scmp.eq.s32.totalorder %s24, 1
      %p37 = por %p35, %p36
      %p38 = scmp.ne.s32.totalorder %s29, %s30
      %p39 = scmp.eq.s32.totalorder %s24, 0
      %p40 = por %p38, %p39
      %p41 = scmp.ne.s32.totalorder %s29, %s30
      %p42 = scmp.eq.s32.totalorder %s25, 1
      %p43 = por %p41, %p42
      %p45 = scmp.ne.s32.totalorder %s30, %s44
      %p46 = scmp.eq.s32.totalorder %s25, 0
      %p47 = por %p45, %p46
      %s48 = ssub.s32 %s19, %s26
      %p49 = scmp.eq.s32.totalorder %s48, 0
      %s51 = sadd.s32 %s50, 1
      %s52 = scalar_select %p49, %s50, %s51
      %p55 = pneg %p49
      %p56 = scmp.eq.s32.totalorder %s19, 1
      %p57 = por %p55, %p56
      %p58 = scmp.ne.s32.totalorder %s50, %s53
      %p59 = scmp.eq.s32.totalorder %s19, 0
      %p60 = por %p58, %p59
      %p61 = scmp.ne.s32.totalorder %s50, %s53
      %p62 = scmp.eq.s32.totalorder %s24, 1
      %p63 = por %p61, %p62
      %p64 = scmp.ne.s32.totalorder %s53, %s54
      %p65 = scmp.eq.s32.totalorder %s24, 0
      %p66 = por %p64, %p65
      %p67 = scmp.ne.s32.totalorder %s53, %s54
      %p68 = scmp.eq.s32.totalorder %s25, 1
      %p69 = por %p67, %p68
      %p71 = scmp.ne.s32.totalorder %s54, %s70
      %p72 = scmp.eq.s32.totalorder %s25, 0
      %p73 = por %p71, %p72
      %s74 = ssub.s32 %s19, %s26
      %p75 = scmp.eq.s32.totalorder %s74, 0
      %s77 = sadd.s32 %s76, 1
      %s78 = scalar_select %p75, %s76, %s77
      %p81 = pneg %p75
      %p82 = scmp.eq.s32.totalorder %s19, 1
      %p83 = por %p81, %p82
      %p84 = scmp.ne.s32.totalorder %s76, %s79
      %p85 = scmp.eq.s32.totalorder %s19, 0
      %p86 = por %p84, %p85
      %p87 = scmp.ne.s32.totalorder %s76, %s79
      %p88 = scmp.eq.s32.totalorder %s24, 1
      %p89 = por %p87, %p88
      %p90 = scmp.ne.s32.totalorder %s79, %s80
      %p91 = scmp.eq.s32.totalorder %s24, 0
      %p92 = por %p90, %p91
      %p93 = scmp.ne.s32.totalorder %s79, %s80
      %p94 = scmp.eq.s32.totalorder %s25, 1
      %p95 = por %p93, %p94
      %p97 = scmp.ne.s32.totalorder %s80, %s96
      %p98 = scmp.eq.s32.totalorder %s25, 0
      %p99 = por %p97, %p98
      %s100 = ssub.s32 %s19, %s26
      %p101 = scmp.eq.s32.totalorder %s100, 0
      %s103 = sadd.s32 %s102, 1
      %s104 = scalar_select %p101, %s102, %s103
      %p107 = pneg %p101
      %p108 = scmp.eq.s32.totalorder %s19, 1
      %p109 = por %p107, %p108
      %p110 = scmp.ne.s32.totalorder %s102, %s105
      %p111 = scmp.eq.s32.totalorder %s19, 0
      %p112 = por %p110, %p111
      %p113 = scmp.ne.s32.totalorder %s102, %s105
      %p114 = scmp.eq.s32.totalorder %s24, 1
      %p115 = por %p113, %p114
      %p116 = scmp.ne.s32.totalorder %s105, %s106
      %p117 = scmp.eq.s32.totalorder %s24, 0
      %p118 = por %p116, %p117
      %p119 = scmp.ne.s32.totalorder %s105, %s106
      %p120 = scmp.eq.s32.totalorder %s25, 1
      %p121 = por %p119, %p120
      %p123 = scmp.ne.s32.totalorder %s106, %s122
      %p124 = scmp.eq.s32.totalorder %s25, 0
      %p125 = por %p123, %p124
      %s127 = sadd.s32 %s126, 1
      %p130 = scmp.eq.s32.totalorder %s19, 1
      %p131 = scmp.ne.s32.totalorder %s126, %s128
      %p132 = scmp.eq.s32.totalorder %s19, 0
      %p133 = por %p131, %p132
      %p134 = scmp.ne.s32.totalorder %s126, %s128
      %p135 = scmp.eq.s32.totalorder %s24, 1
      %p136 = por %p134, %p135
      %p137 = scmp.ne.s32.totalorder %s128, %s129
      %p138 = scmp.eq.s32.totalorder %s24, 0
      %p139 = por %p137, %p138
      %p140 = scmp.ne.s32.totalorder %s128, %s129
      %p141 = scmp.eq.s32.totalorder %s25, 1
      %p142 = por %p140, %p141
      %p144 = scmp.ne.s32.totalorder %s129, %s143
      %p145 = scmp.eq.s32.totalorder %s25, 0
      %p146 = por %p144, %p145
      %s148 = sadd.s32 %s147, 1
      %p151 = scmp.eq.s32.totalorder %s19, 1
      %p152 = scmp.ne.s32.totalorder %s147, %s149
      %p153 = scmp.eq.s32.totalorder %s19, 0
      %p154 = por %p152, %p153
      %p155 = scmp.ne.s32.totalorder %s147, %s149
      %p156 = scmp.eq.s32.totalorder %s24, 1
      %p157 = por %p155, %p156
      %p158 = scmp.ne.s32.totalorder %s149, %s150
      %p159 = scmp.eq.s32.totalorder %s24, 0
      %p160 = por %p158, %p159
      %p161 = scmp.ne.s32.totalorder %s149, %s150
      %p162 = scmp.eq.s32.totalorder %s25, 1
      %p163 = por %p161, %p162
      %p165 = scmp.ne.s32.totalorder %s150, %s164
      %p166 = scmp.eq.s32.totalorder %s25, 0
      %p167 = por %p165, %p166
      %p168 = scmp.le.s32.totalorder 1, %s19
      %p169 = scmp.lt.s32.totalorder %s19, 3
      %p170 = pnand %p168, %p169
      %p171 = pneg %p170
      // Predicated region
      $region9: #{tpu_custom_call.1} parent=5 // pred_check
        _
      $region10: #{tpu_custom_call.1} parent=5 // pred_check_branch
        %173 = sbr.rel (%p170) target = $region12
      $region11: #{tpu_custom_call.1} parent=5 // pred_region
        %s174 = ssub.s32 %s19, 1
        // Predicated region
        $region13: #{tpu_custom_call.1} parent=11 // pred_check
          %p175 = pneg %p40
        $region14: #{tpu_custom_call.1} parent=11 // pred_check_branch
          %177 = sbr.rel (%p175) target = $region16
        $region15: #{tpu_custom_call.1} parent=11 // pred_region
          %s179 = ssub.s32 512, 512
          %180 = vsyncadd [#allocation4], %s179
          %s182 = sshll.u32 [#allocation3], 4
          %s183 = int_to_ptr.vmem [resolvable:$true] %s182
          %185 = dma.hbm_to_vmem [thread:$0]  %s0, 512, %s183, [#allocation4]
        $region16: #{tpu_custom_call.1} parent=11 // pred_fallthru
          _
        // Predicated region
        $region17: #{tpu_custom_call.1} parent=11 // pred_check
          %p186 = pneg %p139
        $region18: #{tpu_custom_call.1} parent=11 // pred_check_branch
          %188 = sbr.rel (%p186) target = $region20
        $region19: #{tpu_custom_call.1} parent=11 // pred_region
          _
        $region20: #{tpu_custom_call.1} parent=11 // pred_fallthru
          _
      $region12: #{tpu_custom_call.1} parent=5 // pred_fallthru
        _
      %p189 = scmp.lt.s32.totalorder %s19, 2
      // Predicated region
      $region21: #{tpu_custom_call.1} parent=5 // pred_check
        %p190 = pneg %p189
      $region22: #{tpu_custom_call.1} parent=5 // pred_check_branch
        %192 = sbr.rel (%p190) target = $region24
      $region23: #{tpu_custom_call.1} parent=5 // pred_region
        // Predicated region
        $region25: #{tpu_custom_call.1} parent=23 // pred_check
          %p193 = pneg %p60
        $region26: #{tpu_custom_call.1} parent=23 // pred_check_branch
          %195 = sbr.rel (%p193) target = $region28
        $region27: #{tpu_custom_call.1} parent=23 // pred_region
          %s196 = sand.u32 %s19, 1
          %s197 = scalar_lea.sflag [#allocation6], %s196
          %s198 = sand.u32 %s50, 1
          %s199 = smul.addr %s198, 2048
          %s200 = scalar_lea.vmem [#allocation5], %s199
          %s202 = ssub.s32 32768, 32768
          %203 = vsyncadd %s197, %s202
          %s204 = smul.addr %s19, 512
          %s205 = smul.addr %s204, 64
          %s206 = scalar_lea.hbm %s1, %s205
          %s207 = sshll.u32 %s200, 4
          %s208 = int_to_ptr.vmem [resolvable:$true] %s207
          %213 = dma.hbm_to_vmem [thread:$0]  %s206, 32768, %s208, %s197, 256, 256, 16
        $region28: #{tpu_custom_call.1} parent=23 // pred_fallthru
          _
        // Predicated region
        $region29: #{tpu_custom_call.1} parent=23 // pred_check
          %p214 = pneg %p86
        $region30: #{tpu_custom_call.1} parent=23 // pred_check_branch
          %216 = sbr.rel (%p214) target = $region32
        $region31: #{tpu_custom_call.1} parent=23 // pred_region
          %s217 = sand.u32 %s19, 1
          %s218 = scalar_lea.sflag [#allocation6], %s217
          %s219 = sand.u32 %s76, 1
          %s220 = smul.addr %s219, 4
          %s221 = scalar_lea.vmem [#allocation7], %s220
          %s222 = smul.u32 4, %s19
          %s224 = ssub.s32 64, 64
          %225 = vsyncadd %s218, %s224
          %s226 = smul.addr %s222, 16
          %s227 = scalar_lea.hbm %s2, %s226
          %s229 = sshll.u32 %s221, 4
          %s230 = int_to_ptr.vmem [resolvable:$true] %s229
          %232 = dma.hbm_to_vmem [thread:$0]  %s227, 64, %s230, %s218
        $region32: #{tpu_custom_call.1} parent=23 // pred_fallthru
          _
        // Predicated region
        $region33: #{tpu_custom_call.1} parent=23 // pred_check
          %p233 = pneg %p112
        $region34: #{tpu_custom_call.1} parent=23 // pred_check_branch
          %235 = sbr.rel (%p233) target = $region36
        $region35: #{tpu_custom_call.1} parent=23 // pred_region
          %s236 = sand.u32 %s102, 1
          %s237 = scalar_lea.sflag [#allocation9], %s236
          %s238 = sand.u32 %s102, 1
          %s239 = smul.addr %s238, 4
          %s240 = scalar_lea.vmem [#allocation8], %s239
          %s241 = smul.u32 4, %s19
          %s243 = ssub.s32 64, 64
          %244 = vsyncadd %s237, %s243
          %s245 = smul.addr %s241, 16
          %s246 = scalar_lea.hbm %s3, %s245
          %s248 = sshll.u32 %s240, 4
          %s249 = int_to_ptr.vmem [resolvable:$true] %s248
          %251 = dma.hbm_to_vmem [thread:$0]  %s246, 64, %s249, %s237
        $region36: #{tpu_custom_call.1} parent=23 // pred_fallthru
          _
      $region24: #{tpu_custom_call.1} parent=5 // pred_fallthru
        _
      %p252 = scmp.le.s32.totalorder 1, %s19
      %p253 = scmp.lt.s32.totalorder %s19, 3
      %p254 = pnand %p252, %p253
      %p255 = pneg %p254
      // Predicated region
      $region37: #{tpu_custom_call.1} parent=5 // pred_check
        _
      $region38: #{tpu_custom_call.1} parent=5 // pred_check_branch
        %257 = sbr.rel (%p254) target = $region40
      $region39: #{tpu_custom_call.1} parent=5 // pred_region
        %s258 = ssub.s32 %s19, 1
        // Predicated region
        $region41: #{tpu_custom_call.1} parent=39 // pred_check
          %p259 = pneg %p40
        $region42: #{tpu_custom_call.1} parent=39 // pred_check_branch
          %261 = sbr.rel (%p259) target = $region44
        $region43: #{tpu_custom_call.1} parent=39 // pred_region
          %262 = dma.done [#allocation4], 512
        $region44: #{tpu_custom_call.1} parent=39 // pred_fallthru
          _
        %s263 = sand.u32 %s24, 1
        %s264 = scalar_lea.sflag [#allocation6], %s263
        %s265 = sand.u32 %s53, 1
        %s266 = smul.addr %s265, 2048
        %s267 = scalar_lea.vmem [#allocation5], %s266
        // Predicated region
        $region45: #{tpu_custom_call.1} parent=39 // pred_check
          %p268 = pneg %p66
        $region46: #{tpu_custom_call.1} parent=39 // pred_check_branch
          %270 = sbr.rel (%p268) target = $region48
        $region47: #{tpu_custom_call.1} parent=39 // pred_region
          %271 = dma.done %s264, 32768
        $region48: #{tpu_custom_call.1} parent=39 // pred_fallthru
          _
        %s272 = sand.u32 %s24, 1
        %s273 = scalar_lea.sflag [#allocation6], %s272
        %s274 = sand.u32 %s79, 1
        %s275 = smul.addr %s274, 4
        %s276 = scalar_lea.vmem [#allocation7], %s275
        // Predicated region
        $region49: #{tpu_custom_call.1} parent=39 // pred_check
          %p277 = pneg %p92
        $region50: #{tpu_custom_call.1} parent=39 // pred_check_branch
          %279 = sbr.rel (%p277) target = $region52
        $region51: #{tpu_custom_call.1} parent=39 // pred_region
          %280 = dma.done %s273, 64
        $region52: #{tpu_custom_call.1} parent=39 // pred_fallthru
          _
        %s281 = sand.u32 %s105, 1
        %s282 = scalar_lea.sflag [#allocation9], %s281
        %s283 = sand.u32 %s105, 1
        %s284 = smul.addr %s283, 4
        %s285 = scalar_lea.vmem [#allocation8], %s284
        // Predicated region
        $region53: #{tpu_custom_call.1} parent=39 // pred_check
          %p286 = pneg %p118
        $region54: #{tpu_custom_call.1} parent=39 // pred_check_branch
          %288 = sbr.rel (%p286) target = $region56
        $region55: #{tpu_custom_call.1} parent=39 // pred_region
          %289 = dma.done %s282, 64
        $region56: #{tpu_custom_call.1} parent=39 // pred_fallthru
          _
        %p290 = pneg %p40
        %p291 = pneg %p37
        %s292 = sand.u32 %s24, 1
        %s293 = scalar_lea.sflag [#allocation6], %s292
        %s294 = sand.u32 %s53, 1
        %s295 = smul.addr %s294, 2048
        %s296 = scalar_lea.vmem [#allocation5], %s295
        %p297 = pneg %p66
        %p298 = pneg %p63
        %s299 = sand.u32 %s24, 1
        %s300 = scalar_lea.sflag [#allocation6], %s299
        %s301 = sand.u32 %s79, 1
        %s302 = smul.addr %s301, 4
        %s303 = scalar_lea.vmem [#allocation7], %s302
        %p304 = pneg %p92
        %p305 = pneg %p89
        %s306 = sand.u32 %s105, 1
        %s307 = scalar_lea.sflag [#allocation9], %s306
        %s308 = sand.u32 %s105, 1
        %s309 = smul.addr %s308, 4
        %s310 = scalar_lea.vmem [#allocation8], %s309
        %p311 = pneg %p118
        %p312 = pneg %p115
        %p313 = pneg %p139
        %p314 = pneg %p136
        %p315 = pneg %p160
        %p316 = pneg %p157
        %s317 = smul.u32 4, %s24
        %s318 = smul.u32 4, %s24
        %p319 = scmp.eq.s32.totalorder %s24, 0
        // Predicated region
        $region57: #{tpu_custom_call.1} parent=39 // pred_check
          %p320 = pneg %p319
        $region58: #{tpu_custom_call.1} parent=39 // pred_check_branch
          %322 = sbr.rel (%p320) target = $region60
        $region59: #{tpu_custom_call.1} parent=39 // pred_region
          %s323 = sld [smem:[#allocation2]]
          %v324 = vstv %s323
          %v325 = vadd.f32 %v324, 0.0
          %vm326 = vcmask 7168
          %327 = vst.msk [vmem:[%s5] sm:$0xff] %vm326, %v325
        $region60: #{tpu_custom_call.1} parent=39 // pred_fallthru
          _
        %v328 = vld [vmem:[#allocation3] sm:$0xff]
        %v329 = vld [vmem:[#allocation3 + $0x8] sm:$0xff]
        %v330 = vld [vmem:[#allocation3 + $0x10] sm:$0xff]
        %v331 = vld [vmem:[#allocation3 + $0x18] sm:$0xff]
        %v332 = vld [vmem:[%s267] sm:$0xff]
        %v333 = vld [vmem:[%s267 + $0x8] sm:$0xff]
        %v334 = vld [vmem:[%s267 + $0x10] sm:$0xff]
        %v335 = vld [vmem:[%s267 + $0x18] sm:$0xff]
        %v336 = vld [vmem:[%s267 + $0x20] sm:$0xff]
        %v337 = vld [vmem:[%s267 + $0x28] sm:$0xff]
        %v338 = vld [vmem:[%s267 + $0x30] sm:$0xff]
        %v339 = vld [vmem:[%s267 + $0x38] sm:$0xff]
        %v340 = vld [vmem:[%s267 + $0x40] sm:$0xff]
        %v341 = vld [vmem:[%s267 + $0x48] sm:$0xff]
        %v342 = vld [vmem:[%s267 + $0x50] sm:$0xff]
        %v343 = vld [vmem:[%s267 + $0x58] sm:$0xff]
        %v344 = vld [vmem:[%s267 + $0x60] sm:$0xff]
        %v345 = vld [vmem:[%s267 + $0x68] sm:$0xff]
        %v346 = vld [vmem:[%s267 + $0x70] sm:$0xff]
        %v347 = vld [vmem:[%s267 + $0x78] sm:$0xff]
        %v348 = vld [vmem:[%s267 + $0x80] sm:$0xff]
        %v349 = vld [vmem:[%s267 + $0x88] sm:$0xff]
        %v350 = vld [vmem:[%s267 + $0x90] sm:$0xff]
        %v351 = vld [vmem:[%s267 + $0x98] sm:$0xff]
        %v352 = vld [vmem:[%s267 + $0xa0] sm:$0xff]
        %v353 = vld [vmem:[%s267 + $0xa8] sm:$0xff]
        %v354 = vld [vmem:[%s267 + $0xb0] sm:$0xff]
        %v355 = vld [vmem:[%s267 + $0xb8] sm:$0xff]
        %v356 = vld [vmem:[%s267 + $0xc0] sm:$0xff]
        %v357 = vld [vmem:[%s267 + $0xc8] sm:$0xff]
        %v358 = vld [vmem:[%s267 + $0xd0] sm:$0xff]
        %v359 = vld [vmem:[%s267 + $0xd8] sm:$0xff]
        %v360 = vld [vmem:[%s267 + $0xe0] sm:$0xff]
        %v361 = vld [vmem:[%s267 + $0xe8] sm:$0xff]
        %v362 = vld [vmem:[%s267 + $0xf0] sm:$0xff]
        %v363 = vld [vmem:[%s267 + $0xf8] sm:$0xff]
        %v364 = vld [vmem:[%s267 + $0x100] sm:$0xff]
        %v365 = vld [vmem:[%s267 + $0x108] sm:$0xff]
        %v366 = vld [vmem:[%s267 + $0x110] sm:$0xff]
        %v367 = vld [vmem:[%s267 + $0x118] sm:$0xff]
        %v368 = vld [vmem:[%s267 + $0x120] sm:$0xff]
        %v369 = vld [vmem:[%s267 + $0x128] sm:$0xff]
        %v370 = vld [vmem:[%s267 + $0x130] sm:$0xff]
        %v371 = vld [vmem:[%s267 + $0x138] sm:$0xff]
        %v372 = vld [vmem:[%s267 + $0x140] sm:$0xff]
        %v373 = vld [vmem:[%s267 + $0x148] sm:$0xff]
        %v374 = vld [vmem:[%s267 + $0x150] sm:$0xff]
        %v375 = vld [vmem:[%s267 + $0x158] sm:$0xff]
        %v376 = vld [vmem:[%s267 + $0x160] sm:$0xff]
        %v377 = vld [vmem:[%s267 + $0x168] sm:$0xff]
        %v378 = vld [vmem:[%s267 + $0x170] sm:$0xff]
        %v379 = vld [vmem:[%s267 + $0x178] sm:$0xff]
        %v380 = vld [vmem:[%s267 + $0x180] sm:$0xff]
        %v381 = vld [vmem:[%s267 + $0x188] sm:$0xff]
        %v382 = vld [vmem:[%s267 + $0x190] sm:$0xff]
        %v383 = vld [vmem:[%s267 + $0x198] sm:$0xff]
        %v384 = vld [vmem:[%s267 + $0x1a0] sm:$0xff]
        %v385 = vld [vmem:[%s267 + $0x1a8] sm:$0xff]
        %v386 = vld [vmem:[%s267 + $0x1b0] sm:$0xff]
        %v387 = vld [vmem:[%s267 + $0x1b8] sm:$0xff]
        %v388 = vld [vmem:[%s267 + $0x1c0] sm:$0xff]
        %v389 = vld [vmem:[%s267 + $0x1c8] sm:$0xff]
        %v390 = vld [vmem:[%s267 + $0x1d0] sm:$0xff]
        %v391 = vld [vmem:[%s267 + $0x1d8] sm:$0xff]
        %v392 = vld [vmem:[%s267 + $0x1e0] sm:$0xff]
        %v393 = vld [vmem:[%s267 + $0x1e8] sm:$0xff]
        %v394 = vld [vmem:[%s267 + $0x1f0] sm:$0xff]
        %v395 = vld [vmem:[%s267 + $0x1f8] sm:$0xff]
        %v396 = vld [vmem:[%s267 + $0x200] sm:$0xff]
        %v397 = vld [vmem:[%s267 + $0x208] sm:$0xff]
        %v398 = vld [vmem:[%s267 + $0x210] sm:$0xff]
        %v399 = vld [vmem:[%s267 + $0x218] sm:$0xff]
        %v400 = vld [vmem:[%s267 + $0x220] sm:$0xff]
        %v401 = vld [vmem:[%s267 + $0x228] sm:$0xff]
        %v402 = vld [vmem:[%s267 + $0x230] sm:$0xff]
        %v403 = vld [vmem:[%s267 + $0x238] sm:$0xff]
        %v404 = vld [vmem:[%s267 + $0x240] sm:$0xff]
        %v405 = vld [vmem:[%s267 + $0x248] sm:$0xff]
        %v406 = vld [vmem:[%s267 + $0x250] sm:$0xff]
        %v407 = vld [vmem:[%s267 + $0x258] sm:$0xff]
        %v408 = vld [vmem:[%s267 + $0x260] sm:$0xff]
        %v409 = vld [vmem:[%s267 + $0x268] sm:$0xff]
        %v410 = vld [vmem:[%s267 + $0x270] sm:$0xff]
        %v411 = vld [vmem:[%s267 + $0x278] sm:$0xff]
        %v412 = vld [vmem:[%s267 + $0x280] sm:$0xff]
        %v413 = vld [vmem:[%s267 + $0x288] sm:$0xff]
        %v414 = vld [vmem:[%s267 + $0x290] sm:$0xff]
        %v415 = vld [vmem:[%s267 + $0x298] sm:$0xff]
        %v416 = vld [vmem:[%s267 + $0x2a0] sm:$0xff]
        %v417 = vld [vmem:[%s267 + $0x2a8] sm:$0xff]
        %v418 = vld [vmem:[%s267 + $0x2b0] sm:$0xff]
        %v419 = vld [vmem:[%s267 + $0x2b8] sm:$0xff]
        %v420 = vld [vmem:[%s267 + $0x2c0] sm:$0xff]
        %v421 = vld [vmem:[%s267 + $0x2c8] sm:$0xff]
        %v422 = vld [vmem:[%s267 + $0x2d0] sm:$0xff]
        %v423 = vld [vmem:[%s267 + $0x2d8] sm:$0xff]
        %v424 = vld [vmem:[%s267 + $0x2e0] sm:$0xff]
        %v425 = vld [vmem:[%s267 + $0x2e8] sm:$0xff]
        %v426 = vld [vmem:[%s267 + $0x2f0] sm:$0xff]
        %v427 = vld [vmem:[%s267 + $0x2f8] sm:$0xff]
        %v428 = vld [vmem:[%s267 + $0x300] sm:$0xff]
        %v429 = vld [vmem:[%s267 + $0x308] sm:$0xff]
        %v430 = vld [vmem:[%s267 + $0x310] sm:$0xff]
        %v431 = vld [vmem:[%s267 + $0x318] sm:$0xff]
        %v432 = vld [vmem:[%s267 + $0x320] sm:$0xff]
        %v433 = vld [vmem:[%s267 + $0x328] sm:$0xff]
        %v434 = vld [vmem:[%s267 + $0x330] sm:$0xff]
        %v435 = vld [vmem:[%s267 + $0x338] sm:$0xff]
        %v436 = vld [vmem:[%s267 + $0x340] sm:$0xff]
        %v437 = vld [vmem:[%s267 + $0x348] sm:$0xff]
        %v438 = vld [vmem:[%s267 + $0x350] sm:$0xff]
        %v439 = vld [vmem:[%s267 + $0x358] sm:$0xff]
        %v440 = vld [vmem:[%s267 + $0x360] sm:$0xff]
        %v441 = vld [vmem:[%s267 + $0x368] sm:$0xff]
        %v442 = vld [vmem:[%s267 + $0x370] sm:$0xff]
        %v443 = vld [vmem:[%s267 + $0x378] sm:$0xff]
        %v444 = vld [vmem:[%s267 + $0x380] sm:$0xff]
        %v445 = vld [vmem:[%s267 + $0x388] sm:$0xff]
        %v446 = vld [vmem:[%s267 + $0x390] sm:$0xff]
        %v447 = vld [vmem:[%s267 + $0x398] sm:$0xff]
        %v448 = vld [vmem:[%s267 + $0x3a0] sm:$0xff]
        %v449 = vld [vmem:[%s267 + $0x3a8] sm:$0xff]
        %v450 = vld [vmem:[%s267 + $0x3b0] sm:$0xff]
        %v451 = vld [vmem:[%s267 + $0x3b8] sm:$0xff]
        %v452 = vld [vmem:[%s267 + $0x3c0] sm:$0xff]
        %v453 = vld [vmem:[%s267 + $0x3c8] sm:$0xff]
        %v454 = vld [vmem:[%s267 + $0x3d0] sm:$0xff]
        %v455 = vld [vmem:[%s267 + $0x3d8] sm:$0xff]
        %v456 = vld [vmem:[%s267 + $0x3e0] sm:$0xff]
        %v457 = vld [vmem:[%s267 + $0x3e8] sm:$0xff]
        %v458 = vld [vmem:[%s267 + $0x3f0] sm:$0xff]
        %v459 = vld [vmem:[%s267 + $0x3f8] sm:$0xff]
        %v460 = vld [vmem:[%s267 + $0x400] sm:$0xff]
        %v461 = vld [vmem:[%s267 + $0x408] sm:$0xff]
        %v462 = vld [vmem:[%s267 + $0x410] sm:$0xff]
        %v463 = vld [vmem:[%s267 + $0x418] sm:$0xff]
        %v464 = vld [vmem:[%s267 + $0x420] sm:$0xff]
        %v465 = vld [vmem:[%s267 + $0x428] sm:$0xff]
        %v466 = vld [vmem:[%s267 + $0x430] sm:$0xff]
        %v467 = vld [vmem:[%s267 + $0x438] sm:$0xff]
        %v468 = vld [vmem:[%s267 + $0x440] sm:$0xff]
        %v469 = vld [vmem:[%s267 + $0x448] sm:$0xff]
        %v470 = vld [vmem:[%s267 + $0x450] sm:$0xff]
        %v471 = vld [vmem:[%s267 + $0x458] sm:$0xff]
        %v472 = vld [vmem:[%s267 + $0x460] sm:$0xff]
        %v473 = vld [vmem:[%s267 + $0x468] sm:$0xff]
        %v474 = vld [vmem:[%s267 + $0x470] sm:$0xff]
        %v475 = vld [vmem:[%s267 + $0x478] sm:$0xff]
        %v476 = vld [vmem:[%s267 + $0x480] sm:$0xff]
        %v477 = vld [vmem:[%s267 + $0x488] sm:$0xff]
        %v478 = vld [vmem:[%s267 + $0x490] sm:$0xff]
        %v479 = vld [vmem:[%s267 + $0x498] sm:$0xff]
        %v480 = vld [vmem:[%s267 + $0x4a0] sm:$0xff]
        %v481 = vld [vmem:[%s267 + $0x4a8] sm:$0xff]
        %v482 = vld [vmem:[%s267 + $0x4b0] sm:$0xff]
        %v483 = vld [vmem:[%s267 + $0x4b8] sm:$0xff]
        %v484 = vld [vmem:[%s267 + $0x4c0] sm:$0xff]
        %v485 = vld [vmem:[%s267 + $0x4c8] sm:$0xff]
        %v486 = vld [vmem:[%s267 + $0x4d0] sm:$0xff]
        %v487 = vld [vmem:[%s267 + $0x4d8] sm:$0xff]
        %v488 = vld [vmem:[%s267 + $0x4e0] sm:$0xff]
        %v489 = vld [vmem:[%s267 + $0x4e8] sm:$0xff]
        %v490 = vld [vmem:[%s267 + $0x4f0] sm:$0xff]
        %v491 = vld [vmem:[%s267 + $0x4f8] sm:$0xff]
        %v492 = vld [vmem:[%s267 + $0x500] sm:$0xff]
        %v493 = vld [vmem:[%s267 + $0x508] sm:$0xff]
        %v494 = vld [vmem:[%s267 + $0x510] sm:$0xff]
        %v495 = vld [vmem:[%s267 + $0x518] sm:$0xff]
        %v496 = vld [vmem:[%s267 + $0x520] sm:$0xff]
        %v497 = vld [vmem:[%s267 + $0x528] sm:$0xff]
        %v498 = vld [vmem:[%s267 + $0x530] sm:$0xff]
        %v499 = vld [vmem:[%s267 + $0x538] sm:$0xff]
        %v500 = vld [vmem:[%s267 + $0x540] sm:$0xff]
        %v501 = vld [vmem:[%s267 + $0x548] sm:$0xff]
        %v502 = vld [vmem:[%s267 + $0x550] sm:$0xff]
        %v503 = vld [vmem:[%s267 + $0x558] sm:$0xff]
        %v504 = vld [vmem:[%s267 + $0x560] sm:$0xff]
        %v505 = vld [vmem:[%s267 + $0x568] sm:$0xff]
        %v506 = vld [vmem:[%s267 + $0x570] sm:$0xff]
        %v507 = vld [vmem:[%s267 + $0x578] sm:$0xff]
        %v508 = vld [vmem:[%s267 + $0x580] sm:$0xff]
        %v509 = vld [vmem:[%s267 + $0x588] sm:$0xff]
        %v510 = vld [vmem:[%s267 + $0x590] sm:$0xff]
        %v511 = vld [vmem:[%s267 + $0x598] sm:$0xff]
        %v512 = vld [vmem:[%s267 + $0x5a0] sm:$0xff]
        %v513 = vld [vmem:[%s267 + $0x5a8] sm:$0xff]
        %v514 = vld [vmem:[%s267 + $0x5b0] sm:$0xff]
        %v515 = vld [vmem:[%s267 + $0x5b8] sm:$0xff]
        %v516 = vld [vmem:[%s267 + $0x5c0] sm:$0xff]
        %v517 = vld [vmem:[%s267 + $0x5c8] sm:$0xff]
        %v518 = vld [vmem:[%s267 + $0x5d0] sm:$0xff]
        %v519 = vld [vmem:[%s267 + $0x5d8] sm:$0xff]
        %v520 = vld [vmem:[%s267 + $0x5e0] sm:$0xff]
        %v521 = vld [vmem:[%s267 + $0x5e8] sm:$0xff]
        %v522 = vld [vmem:[%s267 + $0x5f0] sm:$0xff]
        %v523 = vld [vmem:[%s267 + $0x5f8] sm:$0xff]
        %v524 = vld [vmem:[%s267 + $0x600] sm:$0xff]
        %v525 = vld [vmem:[%s267 + $0x608] sm:$0xff]
        %v526 = vld [vmem:[%s267 + $0x610] sm:$0xff]
        %v527 = vld [vmem:[%s267 + $0x618] sm:$0xff]
        %v528 = vld [vmem:[%s267 + $0x620] sm:$0xff]
        %v529 = vld [vmem:[%s267 + $0x628] sm:$0xff]
        %v530 = vld [vmem:[%s267 + $0x630] sm:$0xff]
        %v531 = vld [vmem:[%s267 + $0x638] sm:$0xff]
        %v532 = vld [vmem:[%s267 + $0x640] sm:$0xff]
        %v533 = vld [vmem:[%s267 + $0x648] sm:$0xff]
        %v534 = vld [vmem:[%s267 + $0x650] sm:$0xff]
        %v535 = vld [vmem:[%s267 + $0x658] sm:$0xff]
        %v536 = vld [vmem:[%s267 + $0x660] sm:$0xff]
        %v537 = vld [vmem:[%s267 + $0x668] sm:$0xff]
        %v538 = vld [vmem:[%s267 + $0x670] sm:$0xff]
        %v539 = vld [vmem:[%s267 + $0x678] sm:$0xff]
        %v540 = vld [vmem:[%s267 + $0x680] sm:$0xff]
        %v541 = vld [vmem:[%s267 + $0x688] sm:$0xff]
        %v542 = vld [vmem:[%s267 + $0x690] sm:$0xff]
        %v543 = vld [vmem:[%s267 + $0x698] sm:$0xff]
        %v544 = vld [vmem:[%s267 + $0x6a0] sm:$0xff]
        %v545 = vld [vmem:[%s267 + $0x6a8] sm:$0xff]
        %v546 = vld [vmem:[%s267 + $0x6b0] sm:$0xff]
        %v547 = vld [vmem:[%s267 + $0x6b8] sm:$0xff]
        %v548 = vld [vmem:[%s267 + $0x6c0] sm:$0xff]
        %v549 = vld [vmem:[%s267 + $0x6c8] sm:$0xff]
        %v550 = vld [vmem:[%s267 + $0x6d0] sm:$0xff]
        %v551 = vld [vmem:[%s267 + $0x6d8] sm:$0xff]
        %v552 = vld [vmem:[%s267 + $0x6e0] sm:$0xff]
        %v553 = vld [vmem:[%s267 + $0x6e8] sm:$0xff]
        %v554 = vld [vmem:[%s267 + $0x6f0] sm:$0xff]
        %v555 = vld [vmem:[%s267 + $0x6f8] sm:$0xff]
        %v556 = vld [vmem:[%s267 + $0x700] sm:$0xff]
        %v557 = vld [vmem:[%s267 + $0x708] sm:$0xff]
        %v558 = vld [vmem:[%s267 + $0x710] sm:$0xff]
        %v559 = vld [vmem:[%s267 + $0x718] sm:$0xff]
        %v560 = vld [vmem:[%s267 + $0x720] sm:$0xff]
        %v561 = vld [vmem:[%s267 + $0x728] sm:$0xff]
        %v562 = vld [vmem:[%s267 + $0x730] sm:$0xff]
        %v563 = vld [vmem:[%s267 + $0x738] sm:$0xff]
        %v564 = vld [vmem:[%s267 + $0x740] sm:$0xff]
        %v565 = vld [vmem:[%s267 + $0x748] sm:$0xff]
        %v566 = vld [vmem:[%s267 + $0x750] sm:$0xff]
        %v567 = vld [vmem:[%s267 + $0x758] sm:$0xff]
        %v568 = vld [vmem:[%s267 + $0x760] sm:$0xff]
        %v569 = vld [vmem:[%s267 + $0x768] sm:$0xff]
        %v570 = vld [vmem:[%s267 + $0x770] sm:$0xff]
        %v571 = vld [vmem:[%s267 + $0x778] sm:$0xff]
        %v572 = vld [vmem:[%s267 + $0x780] sm:$0xff]
        %v573 = vld [vmem:[%s267 + $0x788] sm:$0xff]
        %v574 = vld [vmem:[%s267 + $0x790] sm:$0xff]
        %v575 = vld [vmem:[%s267 + $0x798] sm:$0xff]
        %v576 = vld [vmem:[%s267 + $0x7a0] sm:$0xff]
        %v577 = vld [vmem:[%s267 + $0x7a8] sm:$0xff]
        %v578 = vld [vmem:[%s267 + $0x7b0] sm:$0xff]
        %v579 = vld [vmem:[%s267 + $0x7b8] sm:$0xff]
        %v580 = vld [vmem:[%s267 + $0x7c0] sm:$0xff]
        %v581 = vld [vmem:[%s267 + $0x7c8] sm:$0xff]
        %v582 = vld [vmem:[%s267 + $0x7d0] sm:$0xff]
        %v583 = vld [vmem:[%s267 + $0x7d8] sm:$0xff]
        %v584 = vld [vmem:[%s267 + $0x7e0] sm:$0xff]
        %v585 = vld [vmem:[%s267 + $0x7e8] sm:$0xff]
        %v586 = vld [vmem:[%s267 + $0x7f0] sm:$0xff]
        %v587 = vld [vmem:[%s267 + $0x7f8] sm:$0xff]
        %v588 = vld [vmem:[%s276] sm:$0xf]
        %v590 = vlaneseq
        %v591 = vshrl.u32 %v590, 7
        %v592 = vsub.s32 0, %v591
        %v593 = vrot.slane %v588, %v592
        %v594 = vlaneseq
        %v595 = vshrl.u32 %v594, 7
        %v596 = vsub.s32 1, %v595
        %v597 = vrot.slane %v588, %v596
        %v598 = vlaneseq
        %v599 = vshrl.u32 %v598, 7
        %v600 = vsub.s32 2, %v599
        %v601 = vrot.slane %v588, %v600
        %v602 = vlaneseq
        %v603 = vshrl.u32 %v602, 7
        %v604 = vsub.s32 3, %v603
        %v605 = vrot.slane %v588, %v604
        %v614 = vunpack.c.l.b16 %v328
        %v615 = vunpack.c.h.b16 %v328
        %v616 = vunpack.c.l.b16 %v329
        %v617 = vunpack.c.h.b16 %v329
        %v618 = vunpack.c.l.b16 %v330
        %v619 = vunpack.c.h.b16 %v330
        %v620 = vunpack.c.l.b16 %v331
        %v621 = vunpack.c.h.b16 %v331
        %v622 = vpack.c.b16 %v614, %v614
        %v623 = vpack.c.b16 %v615, %v615
        %v624 = vpack.c.b16 %v616, %v616
        %v625 = vpack.c.b16 %v617, %v617
        %v626 = vpack.c.b16 %v618, %v618
        %v627 = vpack.c.b16 %v619, %v619
        %v628 = vpack.c.b16 %v620, %v620
        %v629 = vpack.c.b16 %v621, %v621
        %v894 = vunpack.c.l.b16 %v332
        %v895 = vunpack.c.h.b16 %v332
        %v896 = vunpack.c.l.b16 %v333
        %v897 = vunpack.c.h.b16 %v333
        %v898 = vunpack.c.l.b16 %v334
        %v899 = vunpack.c.h.b16 %v334
        %v900 = vunpack.c.l.b16 %v335
        %v901 = vunpack.c.h.b16 %v335
        %v902 = vunpack.c.l.b16 %v336
        %v903 = vunpack.c.h.b16 %v336
        %v904 = vunpack.c.l.b16 %v337
        %v905 = vunpack.c.h.b16 %v337
        %v906 = vunpack.c.l.b16 %v338
        %v907 = vunpack.c.h.b16 %v338
        %v908 = vunpack.c.l.b16 %v339
        %v909 = vunpack.c.h.b16 %v339
        %v910 = vunpack.c.l.b16 %v340
        %v911 = vunpack.c.h.b16 %v340
        %v912 = vunpack.c.l.b16 %v341
        %v913 = vunpack.c.h.b16 %v341
        %v914 = vunpack.c.l.b16 %v342
        %v915 = vunpack.c.h.b16 %v342
        %v916 = vunpack.c.l.b16 %v343
        %v917 = vunpack.c.h.b16 %v343
        %v918 = vunpack.c.l.b16 %v344
        %v919 = vunpack.c.h.b16 %v344
        %v920 = vunpack.c.l.b16 %v345
        %v921 = vunpack.c.h.b16 %v345
        %v922 = vunpack.c.l.b16 %v346
        %v923 = vunpack.c.h.b16 %v346
        %v924 = vunpack.c.l.b16 %v347
        %v925 = vunpack.c.h.b16 %v347
        %v926 = vunpack.c.l.b16 %v348
        %v927 = vunpack.c.h.b16 %v348
        %v928 = vunpack.c.l.b16 %v349
        %v929 = vunpack.c.h.b16 %v349
        %v930 = vunpack.c.l.b16 %v350
        %v931 = vunpack.c.h.b16 %v350
        %v932 = vunpack.c.l.b16 %v351
        %v933 = vunpack.c.h.b16 %v351
        %v934 = vunpack.c.l.b16 %v352
        %v935 = vunpack.c.h.b16 %v352
        %v936 = vunpack.c.l.b16 %v353
        %v937 = vunpack.c.h.b16 %v353
        %v938 = vunpack.c.l.b16 %v354
        %v939 = vunpack.c.h.b16 %v354
        %v940 = vunpack.c.l.b16 %v355
        %v941 = vunpack.c.h.b16 %v355
        %v942 = vunpack.c.l.b16 %v356
        %v943 = vunpack.c.h.b16 %v356
        %v944 = vunpack.c.l.b16 %v357
        %v945 = vunpack.c.h.b16 %v357
        %v946 = vunpack.c.l.b16 %v358
        %v947 = vunpack.c.h.b16 %v358
        %v948 = vunpack.c.l.b16 %v359
        %v949 = vunpack.c.h.b16 %v359
        %v950 = vunpack.c.l.b16 %v360
        %v951 = vunpack.c.h.b16 %v360
        %v952 = vunpack.c.l.b16 %v361
        %v953 = vunpack.c.h.b16 %v361
        %v954 = vunpack.c.l.b16 %v362
        %v955 = vunpack.c.h.b16 %v362
        %v956 = vunpack.c.l.b16 %v363
        %v957 = vunpack.c.h.b16 %v363
        %v958 = vunpack.c.l.b16 %v364
        %v959 = vunpack.c.h.b16 %v364
        %v960 = vunpack.c.l.b16 %v365
        %v961 = vunpack.c.h.b16 %v365
        %v962 = vunpack.c.l.b16 %v366
        %v963 = vunpack.c.h.b16 %v366
        %v964 = vunpack.c.l.b16 %v367
        %v965 = vunpack.c.h.b16 %v367
        %v966 = vunpack.c.l.b16 %v368
        %v967 = vunpack.c.h.b16 %v368
        %v968 = vunpack.c.l.b16 %v369
        %v969 = vunpack.c.h.b16 %v369
        %v970 = vunpack.c.l.b16 %v370
        %v971 = vunpack.c.h.b16 %v370
        %v972 = vunpack.c.l.b16 %v371
        %v973 = vunpack.c.h.b16 %v371
        %v974 = vunpack.c.l.b16 %v372
        %v975 = vunpack.c.h.b16 %v372
        %v976 = vunpack.c.l.b16 %v373
        %v977 = vunpack.c.h.b16 %v373
        %v978 = vunpack.c.l.b16 %v374
        %v979 = vunpack.c.h.b16 %v374
        %v980 = vunpack.c.l.b16 %v375
        %v981 = vunpack.c.h.b16 %v375
        %v982 = vunpack.c.l.b16 %v376
        %v983 = vunpack.c.h.b16 %v376
        %v984 = vunpack.c.l.b16 %v377
        %v985 = vunpack.c.h.b16 %v377
        %v986 = vunpack.c.l.b16 %v378
        %v987 = vunpack.c.h.b16 %v378
        %v988 = vunpack.c.l.b16 %v379
        %v989 = vunpack.c.h.b16 %v379
        %v990 = vunpack.c.l.b16 %v380
        %v991 = vunpack.c.h.b16 %v380
        %v992 = vunpack.c.l.b16 %v381
        %v993 = vunpack.c.h.b16 %v381
        %v994 = vunpack.c.l.b16 %v382
        %v995 = vunpack.c.h.b16 %v382
        %v996 = vunpack.c.l.b16 %v383
        %v997 = vunpack.c.h.b16 %v383
        %v998 = vunpack.c.l.b16 %v384
        %v999 = vunpack.c.h.b16 %v384
        %v1000 = vunpack.c.l.b16 %v385
        %v1001 = vunpack.c.h.b16 %v385
        %v1002 = vunpack.c.l.b16 %v386
        %v1003 = vunpack.c.h.b16 %v386
        %v1004 = vunpack.c.l.b16 %v387
        %v1005 = vunpack.c.h.b16 %v387
        %v1006 = vunpack.c.l.b16 %v388
        %v1007 = vunpack.c.h.b16 %v388
        %v1008 = vunpack.c.l.b16 %v389
        %v1009 = vunpack.c.h.b16 %v389
        %v1010 = vunpack.c.l.b16 %v390
        %v1011 = vunpack.c.h.b16 %v390
        %v1012 = vunpack.c.l.b16 %v391
        %v1013 = vunpack.c.h.b16 %v391
        %v1014 = vunpack.c.l.b16 %v392
        %v1015 = vunpack.c.h.b16 %v392
        %v1016 = vunpack.c.l.b16 %v393
        %v1017 = vunpack.c.h.b16 %v393
        %v1018 = vunpack.c.l.b16 %v394
        %v1019 = vunpack.c.h.b16 %v394
        %v1020 = vunpack.c.l.b16 %v395
        %v1021 = vunpack.c.h.b16 %v395
        %v1022 = vunpack.c.l.b16 %v396
        %v1023 = vunpack.c.h.b16 %v396
        %v1024 = vunpack.c.l.b16 %v397
        %v1025 = vunpack.c.h.b16 %v397
        %v1026 = vunpack.c.l.b16 %v398
        %v1027 = vunpack.c.h.b16 %v398
        %v1028 = vunpack.c.l.b16 %v399
        %v1029 = vunpack.c.h.b16 %v399
        %v1030 = vunpack.c.l.b16 %v400
        %v1031 = vunpack.c.h.b16 %v400
        %v1032 = vunpack.c.l.b16 %v401
        %v1033 = vunpack.c.h.b16 %v401
        %v1034 = vunpack.c.l.b16 %v402
        %v1035 = vunpack.c.h.b16 %v402
        %v1036 = vunpack.c.l.b16 %v403
        %v1037 = vunpack.c.h.b16 %v403
        %v1038 = vunpack.c.l.b16 %v404
        %v1039 = vunpack.c.h.b16 %v404
        %v1040 = vunpack.c.l.b16 %v405
        %v1041 = vunpack.c.h.b16 %v405
        %v1042 = vunpack.c.l.b16 %v406
        %v1043 = vunpack.c.h.b16 %v406
        %v1044 = vunpack.c.l.b16 %v407
        %v1045 = vunpack.c.h.b16 %v407
        %v1046 = vunpack.c.l.b16 %v408
        %v1047 = vunpack.c.h.b16 %v408
        %v1048 = vunpack.c.l.b16 %v409
        %v1049 = vunpack.c.h.b16 %v409
        %v1050 = vunpack.c.l.b16 %v410
        %v1051 = vunpack.c.h.b16 %v410
        %v1052 = vunpack.c.l.b16 %v411
        %v1053 = vunpack.c.h.b16 %v411
        %v1054 = vunpack.c.l.b16 %v412
        %v1055 = vunpack.c.h.b16 %v412
        %v1056 = vunpack.c.l.b16 %v413
        %v1057 = vunpack.c.h.b16 %v413
        %v1058 = vunpack.c.l.b16 %v414
        %v1059 = vunpack.c.h.b16 %v414
        %v1060 = vunpack.c.l.b16 %v415
        %v1061 = vunpack.c.h.b16 %v415
        %v1062 = vunpack.c.l.b16 %v416
        %v1063 = vunpack.c.h.b16 %v416
        %v1064 = vunpack.c.l.b16 %v417
        %v1065 = vunpack.c.h.b16 %v417
        %v1066 = vunpack.c.l.b16 %v418
        %v1067 = vunpack.c.h.b16 %v418
        %v1068 = vunpack.c.l.b16 %v419
        %v1069 = vunpack.c.h.b16 %v419
        %v1070 = vunpack.c.l.b16 %v420
        %v1071 = vunpack.c.h.b16 %v420
        %v1072 = vunpack.c.l.b16 %v421
        %v1073 = vunpack.c.h.b16 %v421
        %v1074 = vunpack.c.l.b16 %v422
        %v1075 = vunpack.c.h.b16 %v422
        %v1076 = vunpack.c.l.b16 %v423
        %v1077 = vunpack.c.h.b16 %v423
        %v1078 = vunpack.c.l.b16 %v424
        %v1079 = vunpack.c.h.b16 %v424
        %v1080 = vunpack.c.l.b16 %v425
        %v1081 = vunpack.c.h.b16 %v425
        %v1082 = vunpack.c.l.b16 %v426
        %v1083 = vunpack.c.h.b16 %v426
        %v1084 = vunpack.c.l.b16 %v427
        %v1085 = vunpack.c.h.b16 %v427
        %v1086 = vunpack.c.l.b16 %v428
        %v1087 = vunpack.c.h.b16 %v428
        %v1088 = vunpack.c.l.b16 %v429
        %v1089 = vunpack.c.h.b16 %v429
        %v1090 = vunpack.c.l.b16 %v430
        %v1091 = vunpack.c.h.b16 %v430
        %v1092 = vunpack.c.l.b16 %v431
        %v1093 = vunpack.c.h.b16 %v431
        %v1094 = vunpack.c.l.b16 %v432
        %v1095 = vunpack.c.h.b16 %v432
        %v1096 = vunpack.c.l.b16 %v433
        %v1097 = vunpack.c.h.b16 %v433
        %v1098 = vunpack.c.l.b16 %v434
        %v1099 = vunpack.c.h.b16 %v434
        %v1100 = vunpack.c.l.b16 %v435
        %v1101 = vunpack.c.h.b16 %v435
        %v1102 = vunpack.c.l.b16 %v436
        %v1103 = vunpack.c.h.b16 %v436
        %v1104 = vunpack.c.l.b16 %v437
        %v1105 = vunpack.c.h.b16 %v437
        %v1106 = vunpack.c.l.b16 %v438
        %v1107 = vunpack.c.h.b16 %v438
        %v1108 = vunpack.c.l.b16 %v439
        %v1109 = vunpack.c.h.b16 %v439
        %v1110 = vunpack.c.l.b16 %v440
        %v1111 = vunpack.c.h.b16 %v440
        %v1112 = vunpack.c.l.b16 %v441
        %v1113 = vunpack.c.h.b16 %v441
        %v1114 = vunpack.c.l.b16 %v442
        %v1115 = vunpack.c.h.b16 %v442
        %v1116 = vunpack.c.l.b16 %v443
        %v1117 = vunpack.c.h.b16 %v443
        %v1118 = vunpack.c.l.b16 %v444
        %v1119 = vunpack.c.h.b16 %v444
        %v1120 = vunpack.c.l.b16 %v445
        %v1121 = vunpack.c.h.b16 %v445
        %v1122 = vunpack.c.l.b16 %v446
        %v1123 = vunpack.c.h.b16 %v446
        %v1124 = vunpack.c.l.b16 %v447
        %v1125 = vunpack.c.h.b16 %v447
        %v1126 = vunpack.c.l.b16 %v448
        %v1127 = vunpack.c.h.b16 %v448
        %v1128 = vunpack.c.l.b16 %v449
        %v1129 = vunpack.c.h.b16 %v449
        %v1130 = vunpack.c.l.b16 %v450
        %v1131 = vunpack.c.h.b16 %v450
        %v1132 = vunpack.c.l.b16 %v451
        %v1133 = vunpack.c.h.b16 %v451
        %v1134 = vunpack.c.l.b16 %v452
        %v1135 = vunpack.c.h.b16 %v452
        %v1136 = vunpack.c.l.b16 %v453
        %v1137 = vunpack.c.h.b16 %v453
        %v1138 = vunpack.c.l.b16 %v454
        %v1139 = vunpack.c.h.b16 %v454
        %v1140 = vunpack.c.l.b16 %v455
        %v1141 = vunpack.c.h.b16 %v455
        %v1142 = vunpack.c.l.b16 %v456
        %v1143 = vunpack.c.h.b16 %v456
        %v1144 = vunpack.c.l.b16 %v457
        %v1145 = vunpack.c.h.b16 %v457
        %v1146 = vunpack.c.l.b16 %v458
        %v1147 = vunpack.c.h.b16 %v458
        %v1148 = vunpack.c.l.b16 %v459
        %v1149 = vunpack.c.h.b16 %v459
        %v1150 = vunpack.c.l.b16 %v460
        %v1151 = vunpack.c.h.b16 %v460
        %v1152 = vunpack.c.l.b16 %v461
        %v1153 = vunpack.c.h.b16 %v461
        %v1154 = vunpack.c.l.b16 %v462
        %v1155 = vunpack.c.h.b16 %v462
        %v1156 = vunpack.c.l.b16 %v463
        %v1157 = vunpack.c.h.b16 %v463
        %v1158 = vunpack.c.l.b16 %v464
        %v1159 = vunpack.c.h.b16 %v464
        %v1160 = vunpack.c.l.b16 %v465
        %v1161 = vunpack.c.h.b16 %v465
        %v1162 = vunpack.c.l.b16 %v466
        %v1163 = vunpack.c.h.b16 %v466
        %v1164 = vunpack.c.l.b16 %v467
        %v1165 = vunpack.c.h.b16 %v467
        %v1166 = vunpack.c.l.b16 %v468
        %v1167 = vunpack.c.h.b16 %v468
        %v1168 = vunpack.c.l.b16 %v469
        %v1169 = vunpack.c.h.b16 %v469
        %v1170 = vunpack.c.l.b16 %v470
        %v1171 = vunpack.c.h.b16 %v470
        %v1172 = vunpack.c.l.b16 %v471
        %v1173 = vunpack.c.h.b16 %v471
        %v1174 = vunpack.c.l.b16 %v472
        %v1175 = vunpack.c.h.b16 %v472
        %v1176 = vunpack.c.l.b16 %v473
        %v1177 = vunpack.c.h.b16 %v473
        %v1178 = vunpack.c.l.b16 %v474
        %v1179 = vunpack.c.h.b16 %v474
        %v1180 = vunpack.c.l.b16 %v475
        %v1181 = vunpack.c.h.b16 %v475
        %v1182 = vunpack.c.l.b16 %v476
        %v1183 = vunpack.c.h.b16 %v476
        %v1184 = vunpack.c.l.b16 %v477
        %v1185 = vunpack.c.h.b16 %v477
        %v1186 = vunpack.c.l.b16 %v478
        %v1187 = vunpack.c.h.b16 %v478
        %v1188 = vunpack.c.l.b16 %v479
        %v1189 = vunpack.c.h.b16 %v479
        %v1190 = vunpack.c.l.b16 %v480
        %v1191 = vunpack.c.h.b16 %v480
        %v1192 = vunpack.c.l.b16 %v481
        %v1193 = vunpack.c.h.b16 %v481
        %v1194 = vunpack.c.l.b16 %v482
        %v1195 = vunpack.c.h.b16 %v482
        %v1196 = vunpack.c.l.b16 %v483
        %v1197 = vunpack.c.h.b16 %v483
        %v1198 = vunpack.c.l.b16 %v484
        %v1199 = vunpack.c.h.b16 %v484
        %v1200 = vunpack.c.l.b16 %v485
        %v1201 = vunpack.c.h.b16 %v485
        %v1202 = vunpack.c.l.b16 %v486
        %v1203 = vunpack.c.h.b16 %v486
        %v1204 = vunpack.c.l.b16 %v487
        %v1205 = vunpack.c.h.b16 %v487
        %v1206 = vunpack.c.l.b16 %v488
        %v1207 = vunpack.c.h.b16 %v488
        %v1208 = vunpack.c.l.b16 %v489
        %v1209 = vunpack.c.h.b16 %v489
        %v1210 = vunpack.c.l.b16 %v490
        %v1211 = vunpack.c.h.b16 %v490
        %v1212 = vunpack.c.l.b16 %v491
        %v1213 = vunpack.c.h.b16 %v491
        %v1214 = vunpack.c.l.b16 %v492
        %v1215 = vunpack.c.h.b16 %v492
        %v1216 = vunpack.c.l.b16 %v493
        %v1217 = vunpack.c.h.b16 %v493
        %v1218 = vunpack.c.l.b16 %v494
        %v1219 = vunpack.c.h.b16 %v494
        %v1220 = vunpack.c.l.b16 %v495
        %v1221 = vunpack.c.h.b16 %v495
        %v1222 = vunpack.c.l.b16 %v496
        %v1223 = vunpack.c.h.b16 %v496
        %v1224 = vunpack.c.l.b16 %v497
        %v1225 = vunpack.c.h.b16 %v497
        %v1226 = vunpack.c.l.b16 %v498
        %v1227 = vunpack.c.h.b16 %v498
        %v1228 = vunpack.c.l.b16 %v499
        %v1229 = vunpack.c.h.b16 %v499
        %v1230 = vunpack.c.l.b16 %v500
        %v1231 = vunpack.c.h.b16 %v500
        %v1232 = vunpack.c.l.b16 %v501
        %v1233 = vunpack.c.h.b16 %v501
        %v1234 = vunpack.c.l.b16 %v502
        %v1235 = vunpack.c.h.b16 %v502
        %v1236 = vunpack.c.l.b16 %v503
        %v1237 = vunpack.c.h.b16 %v503
        %v1238 = vunpack.c.l.b16 %v504
        %v1239 = vunpack.c.h.b16 %v504
        %v1240 = vunpack.c.l.b16 %v505
        %v1241 = vunpack.c.h.b16 %v505
        %v1242 = vunpack.c.l.b16 %v506
        %v1243 = vunpack.c.h.b16 %v506
        %v1244 = vunpack.c.l.b16 %v507
        %v1245 = vunpack.c.h.b16 %v507
        %v1246 = vunpack.c.l.b16 %v508
        %v1247 = vunpack.c.h.b16 %v508
        %v1248 = vunpack.c.l.b16 %v509
        %v1249 = vunpack.c.h.b16 %v509
        %v1250 = vunpack.c.l.b16 %v510
        %v1251 = vunpack.c.h.b16 %v510
        %v1252 = vunpack.c.l.b16 %v511
        %v1253 = vunpack.c.h.b16 %v511
        %v1254 = vunpack.c.l.b16 %v512
        %v1255 = vunpack.c.h.b16 %v512
        %v1256 = vunpack.c.l.b16 %v513
        %v1257 = vunpack.c.h.b16 %v513
        %v1258 = vunpack.c.l.b16 %v514
        %v1259 = vunpack.c.h.b16 %v514
        %v1260 = vunpack.c.l.b16 %v515
        %v1261 = vunpack.c.h.b16 %v515
        %v1262 = vunpack.c.l.b16 %v516
        %v1263 = vunpack.c.h.b16 %v516
        %v1264 = vunpack.c.l.b16 %v517
        %v1265 = vunpack.c.h.b16 %v517
        %v1266 = vunpack.c.l.b16 %v518
        %v1267 = vunpack.c.h.b16 %v518
        %v1268 = vunpack.c.l.b16 %v519
        %v1269 = vunpack.c.h.b16 %v519
        %v1270 = vunpack.c.l.b16 %v520
        %v1271 = vunpack.c.h.b16 %v520
        %v1272 = vunpack.c.l.b16 %v521
        %v1273 = vunpack.c.h.b16 %v521
        %v1274 = vunpack.c.l.b16 %v522
        %v1275 = vunpack.c.h.b16 %v522
        %v1276 = vunpack.c.l.b16 %v523
        %v1277 = vunpack.c.h.b16 %v523
        %v1278 = vunpack.c.l.b16 %v524
        %v1279 = vunpack.c.h.b16 %v524
        %v1280 = vunpack.c.l.b16 %v525
        %v1281 = vunpack.c.h.b16 %v525
        %v1282 = vunpack.c.l.b16 %v526
        %v1283 = vunpack.c.h.b16 %v526
        %v1284 = vunpack.c.l.b16 %v527
        %v1285 = vunpack.c.h.b16 %v527
        %v1286 = vunpack.c.l.b16 %v528
        %v1287 = vunpack.c.h.b16 %v528
        %v1288 = vunpack.c.l.b16 %v529
        %v1289 = vunpack.c.h.b16 %v529
        %v1290 = vunpack.c.l.b16 %v530
        %v1291 = vunpack.c.h.b16 %v530
        %v1292 = vunpack.c.l.b16 %v531
        %v1293 = vunpack.c.h.b16 %v531
        %v1294 = vunpack.c.l.b16 %v532
        %v1295 = vunpack.c.h.b16 %v532
        %v1296 = vunpack.c.l.b16 %v533
        %v1297 = vunpack.c.h.b16 %v533
        %v1298 = vunpack.c.l.b16 %v534
        %v1299 = vunpack.c.h.b16 %v534
        %v1300 = vunpack.c.l.b16 %v535
        %v1301 = vunpack.c.h.b16 %v535
        %v1302 = vunpack.c.l.b16 %v536
        %v1303 = vunpack.c.h.b16 %v536
        %v1304 = vunpack.c.l.b16 %v537
        %v1305 = vunpack.c.h.b16 %v537
        %v1306 = vunpack.c.l.b16 %v538
        %v1307 = vunpack.c.h.b16 %v538
        %v1308 = vunpack.c.l.b16 %v539
        %v1309 = vunpack.c.h.b16 %v539
        %v1310 = vunpack.c.l.b16 %v540
        %v1311 = vunpack.c.h.b16 %v540
        %v1312 = vunpack.c.l.b16 %v541
        %v1313 = vunpack.c.h.b16 %v541
        %v1314 = vunpack.c.l.b16 %v542
        %v1315 = vunpack.c.h.b16 %v542
        %v1316 = vunpack.c.l.b16 %v543
        %v1317 = vunpack.c.h.b16 %v543
        %v1318 = vunpack.c.l.b16 %v544
        %v1319 = vunpack.c.h.b16 %v544
        %v1320 = vunpack.c.l.b16 %v545
        %v1321 = vunpack.c.h.b16 %v545
        %v1322 = vunpack.c.l.b16 %v546
        %v1323 = vunpack.c.h.b16 %v546
        %v1324 = vunpack.c.l.b16 %v547
        %v1325 = vunpack.c.h.b16 %v547
        %v1326 = vunpack.c.l.b16 %v548
        %v1327 = vunpack.c.h.b16 %v548
        %v1328 = vunpack.c.l.b16 %v549
        %v1329 = vunpack.c.h.b16 %v549
        %v1330 = vunpack.c.l.b16 %v550
        %v1331 = vunpack.c.h.b16 %v550
        %v1332 = vunpack.c.l.b16 %v551
        %v1333 = vunpack.c.h.b16 %v551
        %v1334 = vunpack.c.l.b16 %v552
        %v1335 = vunpack.c.h.b16 %v552
        %v1336 = vunpack.c.l.b16 %v553
        %v1337 = vunpack.c.h.b16 %v553
        %v1338 = vunpack.c.l.b16 %v554
        %v1339 = vunpack.c.h.b16 %v554
        %v1340 = vunpack.c.l.b16 %v555
        %v1341 = vunpack.c.h.b16 %v555
        %v1342 = vunpack.c.l.b16 %v556
        %v1343 = vunpack.c.h.b16 %v556
        %v1344 = vunpack.c.l.b16 %v557
        %v1345 = vunpack.c.h.b16 %v557
        %v1346 = vunpack.c.l.b16 %v558
        %v1347 = vunpack.c.h.b16 %v558
        %v1348 = vunpack.c.l.b16 %v559
        %v1349 = vunpack.c.h.b16 %v559
        %v1350 = vunpack.c.l.b16 %v560
        %v1351 = vunpack.c.h.b16 %v560
        %v1352 = vunpack.c.l.b16 %v561
        %v1353 = vunpack.c.h.b16 %v561
        %v1354 = vunpack.c.l.b16 %v562
        %v1355 = vunpack.c.h.b16 %v562
        %v1356 = vunpack.c.l.b16 %v563
        %v1357 = vunpack.c.h.b16 %v563
        %v1358 = vunpack.c.l.b16 %v564
        %v1359 = vunpack.c.h.b16 %v564
        %v1360 = vunpack.c.l.b16 %v565
        %v1361 = vunpack.c.h.b16 %v565
        %v1362 = vunpack.c.l.b16 %v566
        %v1363 = vunpack.c.h.b16 %v566
        %v1364 = vunpack.c.l.b16 %v567
        %v1365 = vunpack.c.h.b16 %v567
        %v1366 = vunpack.c.l.b16 %v568
        %v1367 = vunpack.c.h.b16 %v568
        %v1368 = vunpack.c.l.b16 %v569
        %v1369 = vunpack.c.h.b16 %v569
        %v1370 = vunpack.c.l.b16 %v570
        %v1371 = vunpack.c.h.b16 %v570
        %v1372 = vunpack.c.l.b16 %v571
        %v1373 = vunpack.c.h.b16 %v571
        %v1374 = vunpack.c.l.b16 %v572
        %v1375 = vunpack.c.h.b16 %v572
        %v1376 = vunpack.c.l.b16 %v573
        %v1377 = vunpack.c.h.b16 %v573
        %v1378 = vunpack.c.l.b16 %v574
        %v1379 = vunpack.c.h.b16 %v574
        %v1380 = vunpack.c.l.b16 %v575
        %v1381 = vunpack.c.h.b16 %v575
        %v1382 = vunpack.c.l.b16 %v576
        %v1383 = vunpack.c.h.b16 %v576
        %v1384 = vunpack.c.l.b16 %v577
        %v1385 = vunpack.c.h.b16 %v577
        %v1386 = vunpack.c.l.b16 %v578
        %v1387 = vunpack.c.h.b16 %v578
        %v1388 = vunpack.c.l.b16 %v579
        %v1389 = vunpack.c.h.b16 %v579
        %v1390 = vunpack.c.l.b16 %v580
        %v1391 = vunpack.c.h.b16 %v580
        %v1392 = vunpack.c.l.b16 %v581
        %v1393 = vunpack.c.h.b16 %v581
        %v1394 = vunpack.c.l.b16 %v582
        %v1395 = vunpack.c.h.b16 %v582
        %v1396 = vunpack.c.l.b16 %v583
        %v1397 = vunpack.c.h.b16 %v583
        %v1398 = vunpack.c.l.b16 %v584
        %v1399 = vunpack.c.h.b16 %v584
        %v1400 = vunpack.c.l.b16 %v585
        %v1401 = vunpack.c.h.b16 %v585
        %v1402 = vunpack.c.l.b16 %v586
        %v1403 = vunpack.c.h.b16 %v586
        %v1404 = vunpack.c.l.b16 %v587
        %v1405 = vunpack.c.h.b16 %v587
        %v1406 = vpack.c.b16 %v898, %v894
        %v1407 = vpack.c.b16 %v899, %v895
        %v1408 = vpack.c.b16 %v900, %v896
        %v1409 = vpack.c.b16 %v901, %v897
        %v1410 = vpack.c.b16 %v906, %v902
        %v1411 = vpack.c.b16 %v907, %v903
        %v1412 = vpack.c.b16 %v908, %v904
        %v1413 = vpack.c.b16 %v909, %v905
        %v1414 = vpack.c.b16 %v914, %v910
        %v1415 = vpack.c.b16 %v915, %v911
        %v1416 = vpack.c.b16 %v916, %v912
        %v1417 = vpack.c.b16 %v917, %v913
        %v1418 = vpack.c.b16 %v922, %v918
        %v1419 = vpack.c.b16 %v923, %v919
        %v1420 = vpack.c.b16 %v924, %v920
        %v1421 = vpack.c.b16 %v925, %v921
        %v1422 = vpack.c.b16 %v930, %v926
        %v1423 = vpack.c.b16 %v931, %v927
        %v1424 = vpack.c.b16 %v932, %v928
        %v1425 = vpack.c.b16 %v933, %v929
        %v1426 = vpack.c.b16 %v938, %v934
        %v1427 = vpack.c.b16 %v939, %v935
        %v1428 = vpack.c.b16 %v940, %v936
        %v1429 = vpack.c.b16 %v941, %v937
        %v1430 = vpack.c.b16 %v946, %v942
        %v1431 = vpack.c.b16 %v947, %v943
        %v1432 = vpack.c.b16 %v948, %v944
        %v1433 = vpack.c.b16 %v949, %v945
        %v1434 = vpack.c.b16 %v954, %v950
        %v1435 = vpack.c.b16 %v955, %v951
        %v1436 = vpack.c.b16 %v956, %v952
        %v1437 = vpack.c.b16 %v957, %v953
        %v1438 = vpack.c.b16 %v962, %v958
        %v1439 = vpack.c.b16 %v963, %v959
        %v1440 = vpack.c.b16 %v964, %v960
        %v1441 = vpack.c.b16 %v965, %v961
        %v1442 = vpack.c.b16 %v970, %v966
        %v1443 = vpack.c.b16 %v971, %v967
        %v1444 = vpack.c.b16 %v972, %v968
        %v1445 = vpack.c.b16 %v973, %v969
        %v1446 = vpack.c.b16 %v978, %v974
        %v1447 = vpack.c.b16 %v979, %v975
        %v1448 = vpack.c.b16 %v980, %v976
        %v1449 = vpack.c.b16 %v981, %v977
        %v1450 = vpack.c.b16 %v986, %v982
        %v1451 = vpack.c.b16 %v987, %v983
        %v1452 = vpack.c.b16 %v988, %v984
        %v1453 = vpack.c.b16 %v989, %v985
        %v1454 = vpack.c.b16 %v994, %v990
        %v1455 = vpack.c.b16 %v995, %v991
        %v1456 = vpack.c.b16 %v996, %v992
        %v1457 = vpack.c.b16 %v997, %v993
        %v1458 = vpack.c.b16 %v1002, %v998
        %v1459 = vpack.c.b16 %v1003, %v999
        %v1460 = vpack.c.b16 %v1004, %v1000
        %v1461 = vpack.c.b16 %v1005, %v1001
        %v1462 = vpack.c.b16 %v1010, %v1006
        %v1463 = vpack.c.b16 %v1011, %v1007
        %v1464 = vpack.c.b16 %v1012, %v1008
        %v1465 = vpack.c.b16 %v1013, %v1009
        %v1466 = vpack.c.b16 %v1018, %v1014
        %v1467 = vpack.c.b16 %v1019, %v1015
        %v1468 = vpack.c.b16 %v1020, %v1016
        %v1469 = vpack.c.b16 %v1021, %v1017
        %v1470 = vpack.c.b16 %v1026, %v1022
        %v1471 = vpack.c.b16 %v1027, %v1023
        %v1472 = vpack.c.b16 %v1028, %v1024
        %v1473 = vpack.c.b16 %v1029, %v1025
        %v1474 = vpack.c.b16 %v1034, %v1030
        %v1475 = vpack.c.b16 %v1035, %v1031
        %v1476 = vpack.c.b16 %v1036, %v1032
        %v1477 = vpack.c.b16 %v1037, %v1033
        %v1478 = vpack.c.b16 %v1042, %v1038
        %v1479 = vpack.c.b16 %v1043, %v1039
        %v1480 = vpack.c.b16 %v1044, %v1040
        %v1481 = vpack.c.b16 %v1045, %v1041
        %v1482 = vpack.c.b16 %v1050, %v1046
        %v1483 = vpack.c.b16 %v1051, %v1047
        %v1484 = vpack.c.b16 %v1052, %v1048
        %v1485 = vpack.c.b16 %v1053, %v1049
        %v1486 = vpack.c.b16 %v1058, %v1054
        %v1487 = vpack.c.b16 %v1059, %v1055
        %v1488 = vpack.c.b16 %v1060, %v1056
        %v1489 = vpack.c.b16 %v1061, %v1057
        %v1490 = vpack.c.b16 %v1066, %v1062
        %v1491 = vpack.c.b16 %v1067, %v1063
        %v1492 = vpack.c.b16 %v1068, %v1064
        %v1493 = vpack.c.b16 %v1069, %v1065
        %v1494 = vpack.c.b16 %v1074, %v1070
        %v1495 = vpack.c.b16 %v1075, %v1071
        %v1496 = vpack.c.b16 %v1076, %v1072
        %v1497 = vpack.c.b16 %v1077, %v1073
        %v1498 = vpack.c.b16 %v1082, %v1078
        %v1499 = vpack.c.b16 %v1083, %v1079
        %v1500 = vpack.c.b16 %v1084, %v1080
        %v1501 = vpack.c.b16 %v1085, %v1081
        %v1502 = vpack.c.b16 %v1090, %v1086
        %v1503 = vpack.c.b16 %v1091, %v1087
        %v1504 = vpack.c.b16 %v1092, %v1088
        %v1505 = vpack.c.b16 %v1093, %v1089
        %v1506 = vpack.c.b16 %v1098, %v1094
        %v1507 = vpack.c.b16 %v1099, %v1095
        %v1508 = vpack.c.b16 %v1100, %v1096
        %v1509 = vpack.c.b16 %v1101, %v1097
        %v1510 = vpack.c.b16 %v1106, %v1102
        %v1511 = vpack.c.b16 %v1107, %v1103
        %v1512 = vpack.c.b16 %v1108, %v1104
        %v1513 = vpack.c.b16 %v1109, %v1105
        %v1514 = vpack.c.b16 %v1114, %v1110
        %v1515 = vpack.c.b16 %v1115, %v1111
        %v1516 = vpack.c.b16 %v1116, %v1112
        %v1517 = vpack.c.b16 %v1117, %v1113
        %v1518 = vpack.c.b16 %v1122, %v1118
        %v1519 = vpack.c.b16 %v1123, %v1119
        %v1520 = vpack.c.b16 %v1124, %v1120
        %v1521 = vpack.c.b16 %v1125, %v1121
        %v1522 = vpack.c.b16 %v1130, %v1126
        %v1523 = vpack.c.b16 %v1131, %v1127
        %v1524 = vpack.c.b16 %v1132, %v1128
        %v1525 = vpack.c.b16 %v1133, %v1129
        %v1526 = vpack.c.b16 %v1138, %v1134
        %v1527 = vpack.c.b16 %v1139, %v1135
        %v1528 = vpack.c.b16 %v1140, %v1136
        %v1529 = vpack.c.b16 %v1141, %v1137
        %v1530 = vpack.c.b16 %v1146, %v1142
        %v1531 = vpack.c.b16 %v1147, %v1143
        %v1532 = vpack.c.b16 %v1148, %v1144
        %v1533 = vpack.c.b16 %v1149, %v1145
        %v1534 = vpack.c.b16 %v1154, %v1150
        %v1535 = vpack.c.b16 %v1155, %v1151
        %v1536 = vpack.c.b16 %v1156, %v1152
        %v1537 = vpack.c.b16 %v1157, %v1153
        %v1538 = vpack.c.b16 %v1162, %v1158
        %v1539 = vpack.c.b16 %v1163, %v1159
        %v1540 = vpack.c.b16 %v1164, %v1160
        %v1541 = vpack.c.b16 %v1165, %v1161
        %v1542 = vpack.c.b16 %v1170, %v1166
        %v1543 = vpack.c.b16 %v1171, %v1167
        %v1544 = vpack.c.b16 %v1172, %v1168
        %v1545 = vpack.c.b16 %v1173, %v1169
        %v1546 = vpack.c.b16 %v1178, %v1174
        %v1547 = vpack.c.b16 %v1179, %v1175
        %v1548 = vpack.c.b16 %v1180, %v1176
        %v1549 = vpack.c.b16 %v1181, %v1177
        %v1550 = vpack.c.b16 %v1186, %v1182
        %v1551 = vpack.c.b16 %v1187, %v1183
        %v1552 = vpack.c.b16 %v1188, %v1184
        %v1553 = vpack.c.b16 %v1189, %v1185
        %v1554 = vpack.c.b16 %v1194, %v1190
        %v1555 = vpack.c.b16 %v1195, %v1191
        %v1556 = vpack.c.b16 %v1196, %v1192
        %v1557 = vpack.c.b16 %v1197, %v1193
        %v1558 = vpack.c.b16 %v1202, %v1198
        %v1559 = vpack.c.b16 %v1203, %v1199
        %v1560 = vpack.c.b16 %v1204, %v1200
        %v1561 = vpack.c.b16 %v1205, %v1201
        %v1562 = vpack.c.b16 %v1210, %v1206
        %v1563 = vpack.c.b16 %v1211, %v1207
        %v1564 = vpack.c.b16 %v1212, %v1208
        %v1565 = vpack.c.b16 %v1213, %v1209
        %v1566 = vpack.c.b16 %v1218, %v1214
        %v1567 = vpack.c.b16 %v1219, %v1215
        %v1568 = vpack.c.b16 %v1220, %v1216
        %v1569 = vpack.c.b16 %v1221, %v1217
        %v1570 = vpack.c.b16 %v1226, %v1222
        %v1571 = vpack.c.b16 %v1227, %v1223
        %v1572 = vpack.c.b16 %v1228, %v1224
        %v1573 = vpack.c.b16 %v1229, %v1225
        %v1574 = vpack.c.b16 %v1234, %v1230
        %v1575 = vpack.c.b16 %v1235, %v1231
        %v1576 = vpack.c.b16 %v1236, %v1232
        %v1577 = vpack.c.b16 %v1237, %v1233
        %v1578 = vpack.c.b16 %v1242, %v1238
        %v1579 = vpack.c.b16 %v1243, %v1239
        %v1580 = vpack.c.b16 %v1244, %v1240
        %v1581 = vpack.c.b16 %v1245, %v1241
        %v1582 = vpack.c.b16 %v1250, %v1246
        %v1583 = vpack.c.b16 %v1251, %v1247
        %v1584 = vpack.c.b16 %v1252, %v1248
        %v1585 = vpack.c.b16 %v1253, %v1249
        %v1586 = vpack.c.b16 %v1258, %v1254
        %v1587 = vpack.c.b16 %v1259, %v1255
        %v1588 = vpack.c.b16 %v1260, %v1256
        %v1589 = vpack.c.b16 %v1261, %v1257
        %v1590 = vpack.c.b16 %v1266, %v1262
        %v1591 = vpack.c.b16 %v1267, %v1263
        %v1592 = vpack.c.b16 %v1268, %v1264
        %v1593 = vpack.c.b16 %v1269, %v1265
        %v1594 = vpack.c.b16 %v1274, %v1270
        %v1595 = vpack.c.b16 %v1275, %v1271
        %v1596 = vpack.c.b16 %v1276, %v1272
        %v1597 = vpack.c.b16 %v1277, %v1273
        %v1598 = vpack.c.b16 %v1282, %v1278
        %v1599 = vpack.c.b16 %v1283, %v1279
        %v1600 = vpack.c.b16 %v1284, %v1280
        %v1601 = vpack.c.b16 %v1285, %v1281
        %v1602 = vpack.c.b16 %v1290, %v1286
        %v1603 = vpack.c.b16 %v1291, %v1287
        %v1604 = vpack.c.b16 %v1292, %v1288
        %v1605 = vpack.c.b16 %v1293, %v1289
        %v1606 = vpack.c.b16 %v1298, %v1294
        %v1607 = vpack.c.b16 %v1299, %v1295
        %v1608 = vpack.c.b16 %v1300, %v1296
        %v1609 = vpack.c.b16 %v1301, %v1297
        %v1610 = vpack.c.b16 %v1306, %v1302
        %v1611 = vpack.c.b16 %v1307, %v1303
        %v1612 = vpack.c.b16 %v1308, %v1304
        %v1613 = vpack.c.b16 %v1309, %v1305
        %v1614 = vpack.c.b16 %v1314, %v1310
        %v1615 = vpack.c.b16 %v1315, %v1311
        %v1616 = vpack.c.b16 %v1316, %v1312
        %v1617 = vpack.c.b16 %v1317, %v1313
        %v1618 = vpack.c.b16 %v1322, %v1318
        %v1619 = vpack.c.b16 %v1323, %v1319
        %v1620 = vpack.c.b16 %v1324, %v1320
        %v1621 = vpack.c.b16 %v1325, %v1321
        %v1622 = vpack.c.b16 %v1330, %v1326
        %v1623 = vpack.c.b16 %v1331, %v1327
        %v1624 = vpack.c.b16 %v1332, %v1328
        %v1625 = vpack.c.b16 %v1333, %v1329
        %v1626 = vpack.c.b16 %v1338, %v1334
        %v1627 = vpack.c.b16 %v1339, %v1335
        %v1628 = vpack.c.b16 %v1340, %v1336
        %v1629 = vpack.c.b16 %v1341, %v1337
        %v1630 = vpack.c.b16 %v1346, %v1342
        %v1631 = vpack.c.b16 %v1347, %v1343
        %v1632 = vpack.c.b16 %v1348, %v1344
        %v1633 = vpack.c.b16 %v1349, %v1345
        %v1634 = vpack.c.b16 %v1354, %v1350
        %v1635 = vpack.c.b16 %v1355, %v1351
        %v1636 = vpack.c.b16 %v1356, %v1352
        %v1637 = vpack.c.b16 %v1357, %v1353
        %v1638 = vpack.c.b16 %v1362, %v1358
        %v1639 = vpack.c.b16 %v1363, %v1359
        %v1640 = vpack.c.b16 %v1364, %v1360
        %v1641 = vpack.c.b16 %v1365, %v1361
        %v1642 = vpack.c.b16 %v1370, %v1366
        %v1643 = vpack.c.b16 %v1371, %v1367
        %v1644 = vpack.c.b16 %v1372, %v1368
        %v1645 = vpack.c.b16 %v1373, %v1369
        %v1646 = vpack.c.b16 %v1378, %v1374
        %v1647 = vpack.c.b16 %v1379, %v1375
        %v1648 = vpack.c.b16 %v1380, %v1376
        %v1649 = vpack.c.b16 %v1381, %v1377
        %v1650 = vpack.c.b16 %v1386, %v1382
        %v1651 = vpack.c.b16 %v1387, %v1383
        %v1652 = vpack.c.b16 %v1388, %v1384
        %v1653 = vpack.c.b16 %v1389, %v1385
        %v1654 = vpack.c.b16 %v1394, %v1390
        %v1655 = vpack.c.b16 %v1395, %v1391
        %v1656 = vpack.c.b16 %v1396, %v1392
        %v1657 = vpack.c.b16 %v1397, %v1393
        %v1658 = vpack.c.b16 %v1402, %v1398
        %v1659 = vpack.c.b16 %v1403, %v1399
        %v1660 = vpack.c.b16 %v1404, %v1400
        %v1661 = vpack.c.b16 %v1405, %v1401
        %1918 = vmatprep.subr.bf16.mxu0 %v1407
        %1919 = vmatpush1.bf16.msra.mxu0 %v1406
        %1920 = vmatprep.subr.bf16.mxu0 %v1411
        %1921 = vmatpush1.bf16.msra.mxu0 %v1410
        %1922 = vmatprep.subr.bf16.mxu0 %v1415
        %1923 = vmatpush1.bf16.msra.mxu0 %v1414
        %1924 = vmatprep.subr.bf16.mxu0 %v1419
        %1925 = vmatpush1.bf16.msra.mxu0 %v1418
        %1926 = vmatprep.subr.bf16.mxu0 %v1423
        %1927 = vmatpush1.bf16.msra.mxu0 %v1422
        %1928 = vmatprep.subr.bf16.mxu0 %v1427
        %1929 = vmatpush1.bf16.msra.mxu0 %v1426
        %1930 = vmatprep.subr.bf16.mxu0 %v1431
        %1931 = vmatpush1.bf16.msra.mxu0 %v1430
        %1932 = vmatprep.subr.bf16.mxu0 %v1435
        %1933 = vmatpush1.bf16.msra.mxu0 %v1434
        %1934 = vmatprep.subr.bf16.mxu0 %v1439
        %1935 = vmatpush1.bf16.msra.mxu0 %v1438
        %1936 = vmatprep.subr.bf16.mxu0 %v1443
        %1937 = vmatpush1.bf16.msra.mxu0 %v1442
        %1938 = vmatprep.subr.bf16.mxu0 %v1447
        %1939 = vmatpush1.bf16.msra.mxu0 %v1446
        %1940 = vmatprep.subr.bf16.mxu0 %v1451
        %1941 = vmatpush1.bf16.msra.mxu0 %v1450
        %1942 = vmatprep.subr.bf16.mxu0 %v1455
        %1943 = vmatpush1.bf16.msra.mxu0 %v1454
        %1944 = vmatprep.subr.bf16.mxu0 %v1459
        %1945 = vmatpush1.bf16.msra.mxu0 %v1458
        %1946 = vmatprep.subr.bf16.mxu0 %v1463
        %1947 = vmatpush1.bf16.msra.mxu0 %v1462
        %1948 = vmatprep.subr.bf16.mxu0 %v1467
        %1949 = vmatpush1.bf16.msra.mxu0 %v1466
        %1950 = vmatprep.mubr.bf16.mxu0 %v623
        %1951 = vmatmul.mubr.bf16.gmra.mrb[0].mxu0 %v622
        %v1952 = vpop.f32.mrb[0].mxu0
        %v1953 = vadd.f32 %v593, %v1952
        %v1954 = vpop.f32.mrb[0].mxu0
        %v1955 = vadd.f32 %v597, %v1954
        %v1956 = vpop.f32.mrb[0].mxu0
        %v1957 = vpop.f32.mrb[0].mxu0
        %1958 = vdwg.mxu0
        %1959 = vmatprep.subr.bf16.mxu0 %v1471
        %1960 = vmatpush1.bf16.msra.mxu0 %v1470
        %1961 = vmatprep.subr.bf16.mxu0 %v1475
        %1962 = vmatpush1.bf16.msra.mxu0 %v1474
        %1963 = vmatprep.subr.bf16.mxu0 %v1479
        %1964 = vmatpush1.bf16.msra.mxu0 %v1478
        %1965 = vmatprep.subr.bf16.mxu0 %v1483
        %1966 = vmatpush1.bf16.msra.mxu0 %v1482
        %1967 = vmatprep.subr.bf16.mxu0 %v1487
        %1968 = vmatpush1.bf16.msra.mxu0 %v1486
        %1969 = vmatprep.subr.bf16.mxu0 %v1491
        %1970 = vmatpush1.bf16.msra.mxu0 %v1490
        %1971 = vmatprep.subr.bf16.mxu0 %v1495
        %1972 = vmatpush1.bf16.msra.mxu0 %v1494
        %1973 = vmatprep.subr.bf16.mxu0 %v1499
        %1974 = vmatpush1.bf16.msra.mxu0 %v1498
        %1975 = vmatprep.subr.bf16.mxu0 %v1503
        %1976 = vmatpush1.bf16.msra.mxu0 %v1502
        %1977 = vmatprep.subr.bf16.mxu0 %v1507
        %1978 = vmatpush1.bf16.msra.mxu0 %v1506
        %1979 = vmatprep.subr.bf16.mxu0 %v1511
        %1980 = vmatpush1.bf16.msra.mxu0 %v1510
        %1981 = vmatprep.subr.bf16.mxu0 %v1515
        %1982 = vmatpush1.bf16.msra.mxu0 %v1514
        %1983 = vmatprep.subr.bf16.mxu0 %v1519
        %1984 = vmatpush1.bf16.msra.mxu0 %v1518
        %1985 = vmatprep.subr.bf16.mxu0 %v1523
        %1986 = vmatpush1.bf16.msra.mxu0 %v1522
        %1987 = vmatprep.subr.bf16.mxu0 %v1527
        %1988 = vmatpush1.bf16.msra.mxu0 %v1526
        %1989 = vmatprep.subr.bf16.mxu0 %v1531
        %1990 = vmatpush1.bf16.msra.mxu0 %v1530
        %1991 = vmatprep.mubr.bf16.mxu0 %v625
        %1992 = vmatmul.mubr.bf16.gmra.mrb[0].mxu0 %v624
        %v1993 = vpop.f32.mrb[0].mxu0
        %v1994 = vadd.f32 %v1953, %v1993
        %v1995 = vpop.f32.mrb[0].mxu0
        %v1996 = vadd.f32 %v1955, %v1995
        %v1997 = vpop.f32.mrb[0].mxu0
        %v1998 = vpop.f32.mrb[0].mxu0
        %1999 = vdwg.mxu0
        %2000 = vmatprep.subr.bf16.mxu0 %v1535
        %2001 = vmatpush1.bf16.msra.mxu0 %v1534
        %2002 = vmatprep.subr.bf16.mxu0 %v1539
        %2003 = vmatpush1.bf16.msra.mxu0 %v1538
        %2004 = vmatprep.subr.bf16.mxu0 %v1543
        %2005 = vmatpush1.bf16.msra.mxu0 %v1542
        %2006 = vmatprep.subr.bf16.mxu0 %v1547
        %2007 = vmatpush1.bf16.msra.mxu0 %v1546
        %2008 = vmatprep.subr.bf16.mxu0 %v1551
        %2009 = vmatpush1.bf16.msra.mxu0 %v1550
        %2010 = vmatprep.subr.bf16.mxu0 %v1555
        %2011 = vmatpush1.bf16.msra.mxu0 %v1554
        %2012 = vmatprep.subr.bf16.mxu0 %v1559
        %2013 = vmatpush1.bf16.msra.mxu0 %v1558
        %2014 = vmatprep.subr.bf16.mxu0 %v1563
        %2015 = vmatpush1.bf16.msra.mxu0 %v1562
        %2016 = vmatprep.subr.bf16.mxu0 %v1567
        %2017 = vmatpush1.bf16.msra.mxu0 %v1566
        %2018 = vmatprep.subr.bf16.mxu0 %v1571
        %2019 = vmatpush1.bf16.msra.mxu0 %v1570
        %2020 = vmatprep.subr.bf16.mxu0 %v1575
        %2021 = vmatpush1.bf16.msra.mxu0 %v1574
        %2022 = vmatprep.subr.bf16.mxu0 %v1579
        %2023 = vmatpush1.bf16.msra.mxu0 %v1578
        %2024 = vmatprep.subr.bf16.mxu0 %v1583
        %2025 = vmatpush1.bf16.msra.mxu0 %v1582
        %2026 = vmatprep.subr.bf16.mxu0 %v1587
        %2027 = vmatpush1.bf16.msra.mxu0 %v1586
        %2028 = vmatprep.subr.bf16.mxu0 %v1591
        %2029 = vmatpush1.bf16.msra.mxu0 %v1590
        %2030 = vmatprep.subr.bf16.mxu0 %v1595
        %2031 = vmatpush1.bf16.msra.mxu0 %v1594
        %2032 = vmatprep.mubr.bf16.mxu0 %v627
        %2033 = vmatmul.mubr.bf16.gmra.mrb[0].mxu0 %v626
        %v2034 = vpop.f32.mrb[0].mxu0
        %v2035 = vadd.f32 %v1994, %v2034
        %v2036 = vpop.f32.mrb[0].mxu0
        %v2037 = vadd.f32 %v1996, %v2036
        %v2038 = vpop.f32.mrb[0].mxu0
        %v2039 = vpop.f32.mrb[0].mxu0
        %2040 = vdwg.mxu0
        %2041 = vmatprep.subr.bf16.mxu0 %v1599
        %2042 = vmatpush1.bf16.msra.mxu0 %v1598
        %2043 = vmatprep.subr.bf16.mxu0 %v1603
        %2044 = vmatpush1.bf16.msra.mxu0 %v1602
        %2045 = vmatprep.subr.bf16.mxu0 %v1607
        %2046 = vmatpush1.bf16.msra.mxu0 %v1606
        %2047 = vmatprep.subr.bf16.mxu0 %v1611
        %2048 = vmatpush1.bf16.msra.mxu0 %v1610
        %2049 = vmatprep.subr.bf16.mxu0 %v1615
        %2050 = vmatpush1.bf16.msra.mxu0 %v1614
        %2051 = vmatprep.subr.bf16.mxu0 %v1619
        %2052 = vmatpush1.bf16.msra.mxu0 %v1618
        %2053 = vmatprep.subr.bf16.mxu0 %v1623
        %2054 = vmatpush1.bf16.msra.mxu0 %v1622
        %2055 = vmatprep.subr.bf16.mxu0 %v1627
        %2056 = vmatpush1.bf16.msra.mxu0 %v1626
        %2057 = vmatprep.subr.bf16.mxu0 %v1631
        %2058 = vmatpush1.bf16.msra.mxu0 %v1630
        %2059 = vmatprep.subr.bf16.mxu0 %v1635
        %2060 = vmatpush1.bf16.msra.mxu0 %v1634
        %2061 = vmatprep.subr.bf16.mxu0 %v1639
        %2062 = vmatpush1.bf16.msra.mxu0 %v1638
        %2063 = vmatprep.subr.bf16.mxu0 %v1643
        %2064 = vmatpush1.bf16.msra.mxu0 %v1642
        %2065 = vmatprep.subr.bf16.mxu0 %v1647
        %2066 = vmatpush1.bf16.msra.mxu0 %v1646
        %2067 = vmatprep.subr.bf16.mxu0 %v1651
        %2068 = vmatpush1.bf16.msra.mxu0 %v1650
        %2069 = vmatprep.subr.bf16.mxu0 %v1655
        %2070 = vmatpush1.bf16.msra.mxu0 %v1654
        %2071 = vmatprep.subr.bf16.mxu0 %v1659
        %2072 = vmatpush1.bf16.msra.mxu0 %v1658
        %2073 = vmatprep.mubr.bf16.mxu0 %v629
        %2074 = vmatmul.mubr.bf16.gmra.mrb[0].mxu0 %v628
        %v2075 = vpop.f32.mrb[0].mxu0
        %v2076 = vadd.f32 %v2035, %v2075
        %v2077 = vpop.f32.mrb[0].mxu0
        %v2078 = vadd.f32 %v2037, %v2077
        %v2079 = vpop.f32.mrb[0].mxu0
        %v2080 = vpop.f32.mrb[0].mxu0
        %2081 = vdwg.mxu0
        %2082 = vmatprep.subr.bf16.mxu0 %v1409
        %2083 = vmatpush1.bf16.msra.mxu0 %v1408
        %2084 = vmatprep.subr.bf16.mxu0 %v1413
        %2085 = vmatpush1.bf16.msra.mxu0 %v1412
        %2086 = vmatprep.subr.bf16.mxu0 %v1417
        %2087 = vmatpush1.bf16.msra.mxu0 %v1416
        %2088 = vmatprep.subr.bf16.mxu0 %v1421
        %2089 = vmatpush1.bf16.msra.mxu0 %v1420
        %2090 = vmatprep.subr.bf16.mxu0 %v1425
        %2091 = vmatpush1.bf16.msra.mxu0 %v1424
        %2092 = vmatprep.subr.bf16.mxu0 %v1429
        %2093 = vmatpush1.bf16.msra.mxu0 %v1428
        %2094 = vmatprep.subr.bf16.mxu0 %v1433
        %2095 = vmatpush1.bf16.msra.mxu0 %v1432
        %2096 = vmatprep.subr.bf16.mxu0 %v1437
        %2097 = vmatpush1.bf16.msra.mxu0 %v1436
        %2098 = vmatprep.subr.bf16.mxu0 %v1441
        %2099 = vmatpush1.bf16.msra.mxu0 %v1440
        %2100 = vmatprep.subr.bf16.mxu0 %v1445
        %2101 = vmatpush1.bf16.msra.mxu0 %v1444
        %2102 = vmatprep.subr.bf16.mxu0 %v1449
        %2103 = vmatpush1.bf16.msra.mxu0 %v1448
        %2104 = vmatprep.subr.bf16.mxu0 %v1453
        %2105 = vmatpush1.bf16.msra.mxu0 %v1452
        %2106 = vmatprep.subr.bf16.mxu0 %v1457
        %2107 = vmatpush1.bf16.msra.mxu0 %v1456
        %2108 = vmatprep.subr.bf16.mxu0 %v1461
        %2109 = vmatpush1.bf16.msra.mxu0 %v1460
        %2110 = vmatprep.subr.bf16.mxu0 %v1465
        %2111 = vmatpush1.bf16.msra.mxu0 %v1464
        %2112 = vmatprep.subr.bf16.mxu0 %v1469
        %2113 = vmatpush1.bf16.msra.mxu0 %v1468
        %2114 = vmatprep.mubr.bf16.mxu0 %v623
        %2115 = vmatmul.mubr.bf16.gmra.mrb[0].mxu0 %v622
        %v2116 = vpop.f32.mrb[0].mxu0
        %v2117 = vadd.f32 %v601, %v2116
        %v2118 = vpop.f32.mrb[0].mxu0
        %v2119 = vadd.f32 %v605, %v2118
        %v2120 = vpop.f32.mrb[0].mxu0
        %v2121 = vpop.f32.mrb[0].mxu0
        %2122 = vdwg.mxu0
        %2123 = vmatprep.subr.bf16.mxu0 %v1473
        %2124 = vmatpush1.bf16.msra.mxu0 %v1472
        %2125 = vmatprep.subr.bf16.mxu0 %v1477
        %2126 = vmatpush1.bf16.msra.mxu0 %v1476
        %2127 = vmatprep.subr.bf16.mxu0 %v1481
        %2128 = vmatpush1.bf16.msra.mxu0 %v1480
        %2129 = vmatprep.subr.bf16.mxu0 %v1485
        %2130 = vmatpush1.bf16.msra.mxu0 %v1484
        %2131 = vmatprep.subr.bf16.mxu0 %v1489
        %2132 = vmatpush1.bf16.msra.mxu0 %v1488
        %2133 = vmatprep.subr.bf16.mxu0 %v1493
        %2134 = vmatpush1.bf16.msra.mxu0 %v1492
        %2135 = vmatprep.subr.bf16.mxu0 %v1497
        %2136 = vmatpush1.bf16.msra.mxu0 %v1496
        %2137 = vmatprep.subr.bf16.mxu0 %v1501
        %2138 = vmatpush1.bf16.msra.mxu0 %v1500
        %2139 = vmatprep.subr.bf16.mxu0 %v1505
        %2140 = vmatpush1.bf16.msra.mxu0 %v1504
        %2141 = vmatprep.subr.bf16.mxu0 %v1509
        %2142 = vmatpush1.bf16.msra.mxu0 %v1508
        %2143 = vmatprep.subr.bf16.mxu0 %v1513
        %2144 = vmatpush1.bf16.msra.mxu0 %v1512
        %2145 = vmatprep.subr.bf16.mxu0 %v1517
        %2146 = vmatpush1.bf16.msra.mxu0 %v1516
        %2147 = vmatprep.subr.bf16.mxu0 %v1521
        %2148 = vmatpush1.bf16.msra.mxu0 %v1520
        %2149 = vmatprep.subr.bf16.mxu0 %v1525
        %2150 = vmatpush1.bf16.msra.mxu0 %v1524
        %2151 = vmatprep.subr.bf16.mxu0 %v1529
        %2152 = vmatpush1.bf16.msra.mxu0 %v1528
        %2153 = vmatprep.subr.bf16.mxu0 %v1533
        %2154 = vmatpush1.bf16.msra.mxu0 %v1532
        %2155 = vmatprep.mubr.bf16.mxu0 %v625
        %2156 = vmatmul.mubr.bf16.gmra.mrb[0].mxu0 %v624
        %v2157 = vpop.f32.mrb[0].mxu0
        %v2158 = vadd.f32 %v2117, %v2157
        %v2159 = vpop.f32.mrb[0].mxu0
        %v2160 = vadd.f32 %v2119, %v2159
        %v2161 = vpop.f32.mrb[0].mxu0
        %v2162 = vpop.f32.mrb[0].mxu0
        %2163 = vdwg.mxu0
        %2164 = vmatprep.subr.bf16.mxu0 %v1537
        %2165 = vmatpush1.bf16.msra.mxu0 %v1536
        %2166 = vmatprep.subr.bf16.mxu0 %v1541
        %2167 = vmatpush1.bf16.msra.mxu0 %v1540
        %2168 = vmatprep.subr.bf16.mxu0 %v1545
        %2169 = vmatpush1.bf16.msra.mxu0 %v1544
        %2170 = vmatprep.subr.bf16.mxu0 %v1549
        %2171 = vmatpush1.bf16.msra.mxu0 %v1548
        %2172 = vmatprep.subr.bf16.mxu0 %v1553
        %2173 = vmatpush1.bf16.msra.mxu0 %v1552
        %2174 = vmatprep.subr.bf16.mxu0 %v1557
        %2175 = vmatpush1.bf16.msra.mxu0 %v1556
        %2176 = vmatprep.subr.bf16.mxu0 %v1561
        %2177 = vmatpush1.bf16.msra.mxu0 %v1560
        %2178 = vmatprep.subr.bf16.mxu0 %v1565
        %2179 = vmatpush1.bf16.msra.mxu0 %v1564
        %2180 = vmatprep.subr.bf16.mxu0 %v1569
        %2181 = vmatpush1.bf16.msra.mxu0 %v1568
        %2182 = vmatprep.subr.bf16.mxu0 %v1573
        %2183 = vmatpush1.bf16.msra.mxu0 %v1572
        %2184 = vmatprep.subr.bf16.mxu0 %v1577
        %2185 = vmatpush1.bf16.msra.mxu0 %v1576
        %2186 = vmatprep.subr.bf16.mxu0 %v1581
        %2187 = vmatpush1.bf16.msra.mxu0 %v1580
        %2188 = vmatprep.subr.bf16.mxu0 %v1585
        %2189 = vmatpush1.bf16.msra.mxu0 %v1584
        %2190 = vmatprep.subr.bf16.mxu0 %v1589
        %2191 = vmatpush1.bf16.msra.mxu0 %v1588
        %2192 = vmatprep.subr.bf16.mxu0 %v1593
        %2193 = vmatpush1.bf16.msra.mxu0 %v1592
        %2194 = vmatprep.subr.bf16.mxu0 %v1597
        %2195 = vmatpush1.bf16.msra.mxu0 %v1596
        %2196 = vmatprep.mubr.bf16.mxu0 %v627
        %2197 = vmatmul.mubr.bf16.gmra.mrb[0].mxu0 %v626
        %v2198 = vpop.f32.mrb[0].mxu0
        %v2199 = vadd.f32 %v2158, %v2198
        %v2200 = vpop.f32.mrb[0].mxu0
        %v2201 = vadd.f32 %v2160, %v2200
        %v2202 = vpop.f32.mrb[0].mxu0
        %v2203 = vpop.f32.mrb[0].mxu0
        %2204 = vdwg.mxu0
        %2205 = vmatprep.subr.bf16.mxu0 %v1601
        %2206 = vmatpush1.bf16.msra.mxu0 %v1600
        %2207 = vmatprep.subr.bf16.mxu0 %v1605
        %2208 = vmatpush1.bf16.msra.mxu0 %v1604
        %2209 = vmatprep.subr.bf16.mxu0 %v1609
        %2210 = vmatpush1.bf16.msra.mxu0 %v1608
        %2211 = vmatprep.subr.bf16.mxu0 %v1613
        %2212 = vmatpush1.bf16.msra.mxu0 %v1612
        %2213 = vmatprep.subr.bf16.mxu0 %v1617
        %2214 = vmatpush1.bf16.msra.mxu0 %v1616
        %2215 = vmatprep.subr.bf16.mxu0 %v1621
        %2216 = vmatpush1.bf16.msra.mxu0 %v1620
        %2217 = vmatprep.subr.bf16.mxu0 %v1625
        %2218 = vmatpush1.bf16.msra.mxu0 %v1624
        %2219 = vmatprep.subr.bf16.mxu0 %v1629
        %2220 = vmatpush1.bf16.msra.mxu0 %v1628
        %2221 = vmatprep.subr.bf16.mxu0 %v1633
        %2222 = vmatpush1.bf16.msra.mxu0 %v1632
        %2223 = vmatprep.subr.bf16.mxu0 %v1637
        %2224 = vmatpush1.bf16.msra.mxu0 %v1636
        %2225 = vmatprep.subr.bf16.mxu0 %v1641
        %2226 = vmatpush1.bf16.msra.mxu0 %v1640
        %2227 = vmatprep.subr.bf16.mxu0 %v1645
        %2228 = vmatpush1.bf16.msra.mxu0 %v1644
        %2229 = vmatprep.subr.bf16.mxu0 %v1649
        %2230 = vmatpush1.bf16.msra.mxu0 %v1648
        %2231 = vmatprep.subr.bf16.mxu0 %v1653
        %2232 = vmatpush1.bf16.msra.mxu0 %v1652
        %2233 = vmatprep.subr.bf16.mxu0 %v1657
        %2234 = vmatpush1.bf16.msra.mxu0 %v1656
        %2235 = vmatprep.subr.bf16.mxu0 %v1661
        %2236 = vmatpush1.bf16.msra.mxu0 %v1660
        %2237 = vmatprep.mubr.bf16.mxu0 %v629
        %2238 = vmatmul.mubr.bf16.gmra.mrb[0].mxu0 %v628
        %v2239 = vpop.f32.mrb[0].mxu0
        %v2240 = vadd.f32 %v2199, %v2239
        %v2241 = vpop.f32.mrb[0].mxu0
        %v2242 = vadd.f32 %v2201, %v2241
        %v2243 = vpop.f32.mrb[0].mxu0
        %v2244 = vpop.f32.mrb[0].mxu0
        %2245 = vdwg.mxu0
        %v2246 = vtanh.pop %v2076
        %v2247 = vtanh.pop %v2078
        %v2248 = vtanh.pop %v2240
        %v2249 = vtanh.pop %v2242
        %v2250 = vld [vmem:[%s5] sm:$0xff]
        %v2251 = vld [vmem:[%s285] sm:$0xf]
        %v2253 = vlaneseq
        %v2254 = vshrl.u32 %v2253, 7
        %v2255 = vsub.s32 0, %v2254
        %v2256 = vrot.slane %v2251, %v2255
        %v2257 = vlaneseq
        %v2258 = vshrl.u32 %v2257, 7
        %v2259 = vsub.s32 1, %v2258
        %v2260 = vrot.slane %v2251, %v2259
        %v2261 = vlaneseq
        %v2262 = vshrl.u32 %v2261, 7
        %v2263 = vsub.s32 2, %v2262
        %v2264 = vrot.slane %v2251, %v2263
        %v2265 = vlaneseq
        %v2266 = vshrl.u32 %v2265, 7
        %v2267 = vsub.s32 3, %v2266
        %v2268 = vrot.slane %v2251, %v2267
        %v2273 = vmul.f32 %v2246, %v2256
        %v2274 = vmul.f32 %v2247, %v2260
        %v2275 = vmul.f32 %v2248, %v2264
        %v2276 = vmul.f32 %v2249, %v2268
        %v2277 = vadd.f32 %v2273, %v2274
        %v2278 = vadd.f32 %v2277, %v2275
        %v2279 = vadd.f32 %v2278, %v2276
        %2280 = vadd.xlane.f32.xlu0 %v2279
        %v2281 = vpop.xlane.xlu0 %2280
        %v2282 = vadd.f32 %v2250, %v2281
        %vm2283 = vcmask 7168
        %2284 = vst.msk [vmem:[%s5] sm:$0xff] %vm2283, %v2282
        // Predicated region
        $region61: #{tpu_custom_call.1} parent=39 // pred_check
          %p2285 = pneg %p157
        $region62: #{tpu_custom_call.1} parent=39 // pred_check_branch
          %2287 = sbr.rel (%p2285) target = $region64
        $region63: #{tpu_custom_call.1} parent=39 // pred_region
          _
        $region64: #{tpu_custom_call.1} parent=39 // pred_fallthru
          _
        // Predicated region
        $region65: #{tpu_custom_call.1} parent=39 // pred_check
          %p2288 = pneg %p157
        $region66: #{tpu_custom_call.1} parent=39 // pred_check_branch
          %2290 = sbr.rel (%p2288) target = $region68
        $region67: #{tpu_custom_call.1} parent=39 // pred_region
          _
        $region68: #{tpu_custom_call.1} parent=39 // pred_fallthru
          _
      $region40: #{tpu_custom_call.1} parent=5 // pred_fallthru
        _
      %p2291 = scmp.le.s32.totalorder 2, %s19
      // Predicated region
      $region69: #{tpu_custom_call.1} parent=5 // pred_check
        %p2292 = pneg %p2291
      $region70: #{tpu_custom_call.1} parent=5 // pred_check_branch
        %2294 = sbr.rel (%p2292) target = $region72
      $region71: #{tpu_custom_call.1} parent=5 // pred_region
        %s2295 = ssub.s32 %s19, 2
      $region72: #{tpu_custom_call.1} parent=5 // pred_fallthru
        _
    $region6: #{tpu_custom_call.1} parent=1 // loop_footer
      %s23 = sadd.s32 1, %s19
    $region7: #{tpu_custom_call.1} parent=1 // loop_footer_branch
      %18 = sbr.rel target = $region3
    $region8: #{tpu_custom_call.1} parent=1 // loop_exit
      _
    %2296 = vsyncpa [#allocation4], 1
    %s2297 = scalar_lea.sflag [#allocation4], 1
    %2298 = vsyncpa %s2297, 1
    %2299 = vsyncpa [#allocation6], 1
    %s2300 = scalar_lea.sflag [#allocation6], 1
    %2301 = vsyncpa %s2300, 1
    %2302 = vsyncpa [#allocation9], 1
    %s2303 = scalar_lea.sflag [#allocation9], 1
    %2304 = vsyncpa %s2303, 1

</llo_original>
